<compile_context>
chip_gen: v7x
topology: tpu7x:2x2x1
jax: 0.10.0
libtpu: 0.0.40
codegen_flags: <defaults>
</compile_context>

<pallas_src>
import jax
import jax.numpy as jnp
from jax import lax
from jax.experimental import pallas as pl
from jax.experimental.pallas import tpu as pltpu
import numpy as np


# ----------------------------- Pallas kernel --------------------------------

def _shift_down(m):
    """row l -> value of row l-1; row 0 becomes 0 (conv left zero-padding)."""
    rolled = pltpu.roll(m, shift=1, axis=0)
    row = lax.broadcasted_iota(jnp.int32, m.shape, 0)
    return jnp.where(row == 0, 0.0, rolled)


def _shift_up(m):
    """row l -> value of row l+1; last row becomes 0 (conv right zero-padding)."""
    n = m.shape[0]
    rolled = pltpu.roll(m, shift=n - 1, axis=0)
    row = lax.broadcasted_iota(jnp.int32, m.shape, 0)
    return jnp.where(row == n - 1, 0.0, rolled)


def _upsample_fused_kernel(x_ref, ce_ref, co_ref, gx_ref, bg_ref,
                           pce_ref, pco_ref, pe2_ref, po2_ref,
                           s1_ref, t1_ref, s2_ref, t2_ref,
                           oe_ref, oo_ref):
    """Fused UpSample for one batch element, in even/odd time-phase form.

    x_ref : (1, L, Cin_p)            input of the ConvTranspose
    ce/co : (1, L, C)                context at even / odd time positions
    gx    : (Cin_p, 4C)  folded ConvTranspose+conv1 y-branch  [e-ip | e-sd | o-ip | o-su]
    bg    : (1, 4C)      folded ConvTranspose bias terms (same packing)
    pce   : (C, 3C)      conv1 ctx taps for even-phase ctx  [Kc1 | Kc0 | Kc2]
    pco   : (C, 3C)      conv1 ctx taps for odd-phase  ctx  [Kc2 | Kc0 | Kc1]
    pe2   : (C, 3C)      conv2 taps applied to h_even       [V1 | V0 | V2]
    po2   : (C, 3C)      conv2 taps applied to h_odd        [V2 | V0 | V1]
    s*/t* : (1, C)       folded BatchNorm scale / shift
    oe/oo : (1, L, C)    output at even / odd time positions
    """
    # TODO(synk): dropout (p=0.1) and training-mode BatchNorm batch statistics are
    # treated as inference-time (dropout = identity, BN = folded scale/shift).
    C = oe_ref.shape[-1]
    x = x_ref[0]                                   # (L, Cin_p)
    ce = ce_ref[0]                                 # (L, C)
    co = co_ref[0]                                 # (L, C)

    # ConvTranspose + conv1 y-branch, fully folded: one wide MXU matmul.
    xg = jnp.dot(x, gx_ref[...], preferred_element_type=jnp.float32) + bg_ref[...]
    # conv1 ctx-branch: 3 taps packed into one wide matmul per phase.
    cg_e = jnp.dot(ce, pce_ref[...], preferred_element_type=jnp.float32)
    cg_o = jnp.dot(co, pco_ref[...], preferred_element_type=jnp.float32)

    # h1[2l]   = yo[l-1]Ky0 + ye[l]Ky1 + yo[l]Ky2 + co[l-1]Kc0 + ce[l]Kc1 + co[l]Kc2
    # h1[2l+1] = ye[l]Ky0 + yo[l]Ky1 + ye[l+1]Ky2 + ce[l]Kc0 + co[l]Kc1 + ce[l+1]Kc2
    h_e = (xg[:, 0 * C:1 * C] + cg_e[:, 0 * C:1 * C] + cg_o[:, 0 * C:1 * C]
           + _shift_down(xg[:, 1 * C:2 * C] + cg_o[:, 1 * C:2 * C]))
    h_o = (xg[:, 2 * C:3 * C] + cg_e[:, 1 * C:2 * C] + cg_o[:, 2 * C:3 * C]
           + _shift_up(xg[:, 3 * C:4 * C] + cg_e[:, 2 * C:3 * C]))

    s1 = s1_ref[...]
    t1 = t1_ref[...]
    h_e = jnp.maximum(h_e * s1 + t1, 0.0)
    h_o = jnp.maximum(h_o * s1 + t1, 0.0)

    # conv2 (kernel 3), taps packed, per phase.
    g_e = jnp.dot(h_e, pe2_ref[...], preferred_element_type=jnp.float32)
    g_o = jnp.dot(h_o, po2_ref[...], preferred_element_type=jnp.float32)

    # o[2l]   = h_o[l-1]V0 + h_e[l]V1 + h_o[l]V2
    # o[2l+1] = h_e[l]V0 + h_o[l]V1 + h_e[l+1]V2
    o_e = g_e[:, 0 * C:1 * C] + g_o[:, 0 * C:1 * C] + _shift_down(g_o[:, 1 * C:2 * C])
    o_o = g_e[:, 1 * C:2 * C] + g_o[:, 2 * C:3 * C] + _shift_up(g_e[:, 2 * C:3 * C])

    s2 = s2_ref[...]
    t2 = t2_ref[...]
    oe_ref[0] = jnp.maximum(o_e * s2 + t2, 0.0)
    oo_ref[0] = jnp.maximum(o_o * s2 + t2, 0.0)


# ------------------------------ JAX wrapper ----------------------------------

def _round_up(n, m):
    return ((n + m - 1) // m) * m


@jax.jit
def upsample_forward(x_ncl, ctx_ncl, p):
    """x_ncl: (B, Cin, L); ctx_ncl: (B, Cout, 2L)  ->  (B, Cout, 2L)."""
    B, Cin, L = x_ncl.shape
    Cout = p["wt"].shape[1]
    T = 2 * L
    f32 = jnp.float32

    # lane-dense padding targets (multiples of 128)
    Cp = _round_up(Cout, 128)
    Cin_p = _round_up(Cin, 128)

    # ---- activations: NCL -> NLC, split ctx into even/odd phases, pad lanes ----
    x_nlc = jnp.transpose(x_ncl, (0, 2, 1)).astype(f32)            # (B, L, Cin)
    x_nlc = jnp.pad(x_nlc, ((0, 0), (0, 0), (0, Cin_p - Cin)))
    ctx_nlc = jnp.transpose(ctx_ncl, (0, 2, 1)).astype(f32)        # (B, T, Cout)
    ctx_nlc = jnp.pad(ctx_nlc, ((0, 0), (0, 0), (0, Cp - Cout)))
    ce = ctx_nlc[:, 0::2, :]                                       # (B, L, Cp)
    co = ctx_nlc[:, 1::2, :]                                       # (B, L, Cp)

    # ---- weights: (in, out) layout, zero-padded, taps packed wide --------------
    def padded(m, rows, cols):
        m = m.astype(f32)
        return jnp.pad(m, ((0, rows - m.shape[0]), (0, cols - m.shape[1])))

    W0 = padded(p["wt"][:, :, 0], Cin_p, Cp)                       # ConvTranspose k=0
    W1 = padded(p["wt"][:, :, 1], Cin_p, Cp)                       # ConvTranspose k=1
    bt = jnp.pad(p["bt"].astype(f32), (0, Cp - Cout)).reshape(1, Cp)

    Ky = [padded(p["w1"][:, :Cout, d].T, Cp, Cp) for d in range(3)]   # conv1 y-branch
    Kc = [padded(p["w1"][:, Cout:, d].T, Cp, Cp) for d in range(3)]   # conv1 ctx-branch
    V = [padded(p["w2"][:, :, d].T, Cp, Cp) for d in range(3)]        # conv2

    # x -> h1 folded matrices (ConvTranspose fused into conv1's y-branch);
    # packing: [even in-place | even shift-down | odd in-place | odd shift-up]
    Gx = jnp.concatenate([W0 @ Ky[1] + W1 @ Ky[2],
                          W1 @ Ky[0],
                          W0 @ Ky[0] + W1 @ Ky[1],
                          W0 @ Ky[2]], axis=1)                      # (Cin_p, 4Cp)
    bg = jnp.concatenate([bt @ (Ky[1] + Ky[2]),
                          bt @ Ky[0],
                          bt @ (Ky[0] + Ky[1]),
                          bt @ Ky[2]], axis=1)                      # (1, 4Cp)

    Pce = jnp.concatenate([Kc[1], Kc[0], Kc[2]], axis=1)            # (Cp, 3Cp)
    Pco = jnp.concatenate([Kc[2], Kc[0], Kc[1]], axis=1)
    Pe2 = jnp.concatenate([V[1], V[0], V[2]], axis=1)
    Po2 = jnp.concatenate([V[2], V[0], V[1]], axis=1)

    # folded BatchNorm (eval mode) affine terms
    eps = 1e-5
    s1 = p["gamma1"] / jnp.sqrt(p["var1"] + eps)
    t1 = p["beta1"] - p["mean1"] * s1
    s2 = p["gamma2"] / jnp.sqrt(p["var2"] + eps)
    t2 = p["beta2"] - p["mean2"] * s2
    s1 = jnp.pad(s1.astype(f32), (0, Cp - Cout)).reshape(1, Cp)
    t1 = jnp.pad(t1.astype(f32), (0, Cp - Cout)).reshape(1, Cp)
    s2 = jnp.pad(s2.astype(f32), (0, Cp - Cout)).reshape(1, Cp)
    t2 = jnp.pad(t2.astype(f32), (0, Cp - Cout)).reshape(1, Cp)

    oe, oo = pl.pallas_call(
        _upsample_fused_kernel,
        out_shape=(jax.ShapeDtypeStruct((B, L, Cp), f32),
                   jax.ShapeDtypeStruct((B, L, Cp), f32)),
        grid=(B,),
        in_specs=[
            pl.BlockSpec((1, L, Cin_p), lambda b: (b, 0, 0)),   # x
            pl.BlockSpec((1, L, Cp), lambda b: (b, 0, 0)),      # ctx even
            pl.BlockSpec((1, L, Cp), lambda b: (b, 0, 0)),      # ctx odd
            pl.BlockSpec((Cin_p, 4 * Cp), lambda b: (0, 0)),    # Gx
            pl.BlockSpec((1, 4 * Cp), lambda b: (0, 0)),        # bg
            pl.BlockSpec((Cp, 3 * Cp), lambda b: (0, 0)),       # Pce
            pl.BlockSpec((Cp, 3 * Cp), lambda b: (0, 0)),       # Pco
            pl.BlockSpec((Cp, 3 * Cp), lambda b: (0, 0)),       # Pe2
            pl.BlockSpec((Cp, 3 * Cp), lambda b: (0, 0)),       # Po2
            pl.BlockSpec((1, Cp), lambda b: (0, 0)),            # s1
            pl.BlockSpec((1, Cp), lambda b: (0, 0)),            # t1
            pl.BlockSpec((1, Cp), lambda b: (0, 0)),            # s2
            pl.BlockSpec((1, Cp), lambda b: (0, 0)),            # t2
        ],
        out_specs=(pl.BlockSpec((1, L, Cp), lambda b: (b, 0, 0)),
                   pl.BlockSpec((1, L, Cp), lambda b: (b, 0, 0))),
        compiler_params=pltpu.CompilerParams(
            dimension_semantics=("parallel",),
            vmem_limit_bytes=64 * 1024 * 1024),
    )(x_nlc, ce, co, Gx, bg, Pce, Pco, Pe2, Po2, s1, t1, s2, t2)

    # Interleave even/odd phases, drop channel padding, back to NCL — all fused by
    # XLA into the single output-copy pass.
    out = jnp.stack([oe, oo], axis=2).reshape(B, T, Cp)[:, :, :Cout]
    return jnp.transpose(out, (0, 2, 1))


# -------------------------- pure-JAX reference -------------------------------

def reference_forward(x_ncl, ctx_ncl, p):
    B, Cin, L = x_ncl.shape
    Cout = p["wt"].shape[1]
    t = jnp.einsum("bcl,cok->bolk", x_ncl, p["wt"])      # (B, Cout, L, 2)
    y = t.reshape(B, Cout, 2 * L) + p["bt"][None, :, None]
    cat = jnp.concatenate([y, ctx_ncl], axis=1)
    eps = 1e-5

    def bn_relu(z, gamma, beta, mean, var):
        s = gamma / jnp.sqrt(var + eps)
        return jnp.maximum(z * s[None, :, None] + (beta - mean * s)[None, :, None], 0.0)

    dn = ("NCH", "OIH", "NCH")
    h = lax.conv_general_dilated(cat, p["w1"], (1,), ((1, 1),), dimension_numbers=dn)
    h = bn_relu(h, p["gamma1"], p["beta1"], p["mean1"], p["var1"])
    h = lax.conv_general_dilated(h, p["w2"], (1,), ((1, 1),), dimension_numbers=dn)
    return bn_relu(h, p["gamma2"], p["beta2"], p["mean2"], p["var2"])


# --------------------------------- main ---------------------------------------

if __name__ == "__main__":
    B, Cin, Cout, L = 2, 4, 8, 8          # x: (B, Cin, L), context: (B, Cout, 2L)
    key = jax.random.PRNGKey(0)
    ks = jax.random.split(key, 6)

    params = {
        # ConvTranspose1d: weight (Cin, Cout, 2), bias (Cout,)
        "wt": 0.1 * jax.random.normal(ks[0], (Cin, Cout, 2), jnp.float32),
        "bt": 0.1 * jax.random.normal(ks[1], (Cout,), jnp.float32),
        # ConvLayer conv1: (Cout, 2*Cout, 3); conv2: (Cout, Cout, 3); no bias
        "w1": 0.1 * jax.random.normal(ks[2], (Cout, 2 * Cout, 3), jnp.float32),
        "w2": 0.1 * jax.random.normal(ks[3], (Cout, Cout, 3), jnp.float32),
        # BatchNorm1d defaults: gamma=1, beta=0, running_mean=0, running_var=1
        "gamma1": jnp.ones((Cout,), jnp.float32),
        "beta1": jnp.zeros((Cout,), jnp.float32),
        "mean1": jnp.zeros((Cout,), jnp.float32),
        "var1": jnp.ones((Cout,), jnp.float32),
        "gamma2": jnp.ones((Cout,), jnp.float32),
        "beta2": jnp.zeros((Cout,), jnp.float32),
        "mean2": jnp.zeros((Cout,), jnp.float32),
        "var2": jnp.ones((Cout,), jnp.float32),
    }

    x = jax.random.normal(ks[4], (B, Cin, L), jnp.float32)
    context = jax.random.normal(ks[5], (B, Cout, 2 * L), jnp.float32)

    out = upsample_forward(x, context, params)
    out = jax.block_until_ready(out)

    ref = jax.block_until_ready(reference_forward(x, context, params))
    np.testing.assert_allclose(np.asarray(out), np.asarray(ref), rtol=1e-4, atol=1e-4)
    assert out.shape == (B, Cout, 2 * L)

    print("KERNEL_OK")
</pallas_src>

<mosaic_0001>
module attributes {stable_mosaic.version = 11 : i64} {
  func.func @_upsample_fused_kernel(%arg0: i32, %arg1: memref<1x8x128xf32, #tpu.memory_space<vmem>>, %arg2: memref<1x8x128xf32, #tpu.memory_space<vmem>>, %arg3: memref<1x8x128xf32, #tpu.memory_space<vmem>>, %arg4: memref<128x512xf32, #tpu.memory_space<vmem>>, %arg5: memref<1x512xf32, #tpu.memory_space<vmem>>, %arg6: memref<128x384xf32, #tpu.memory_space<vmem>>, %arg7: memref<128x384xf32, #tpu.memory_space<vmem>>, %arg8: memref<128x384xf32, #tpu.memory_space<vmem>>, %arg9: memref<128x384xf32, #tpu.memory_space<vmem>>, %arg10: memref<1x128xf32, #tpu.memory_space<vmem>>, %arg11: memref<1x128xf32, #tpu.memory_space<vmem>>, %arg12: memref<1x128xf32, #tpu.memory_space<vmem>>, %arg13: memref<1x128xf32, #tpu.memory_space<vmem>>, %arg14: memref<1x8x128xf32, #tpu.memory_space<vmem>>, %arg15: memref<1x8x128xf32, #tpu.memory_space<vmem>>) attributes {dimension_semantics = [#tpu.dimension_semantics<parallel>], iteration_bounds = array<i64: 2>, scalar_prefetch = 0 : i64, scratch_operands = 0 : i64, tpu.core_type = #tpu.core_type<tc>, window_params = [{transform_indices = @transform_0, window_bounds = array<i64: 1, 8, 128>}, {transform_indices = @transform_1, window_bounds = array<i64: 1, 8, 128>}, {transform_indices = @transform_2, window_bounds = array<i64: 1, 8, 128>}, {pipeline_mode = #tpu.pipeline_mode<synchronous>, transform_indices = @transform_3, window_bounds = array<i64: 128, 512>}, {pipeline_mode = #tpu.pipeline_mode<synchronous>, transform_indices = @transform_4, window_bounds = array<i64: 1, 512>}, {pipeline_mode = #tpu.pipeline_mode<synchronous>, transform_indices = @transform_5, window_bounds = array<i64: 128, 384>}, {pipeline_mode = #tpu.pipeline_mode<synchronous>, transform_indices = @transform_6, window_bounds = array<i64: 128, 384>}, {pipeline_mode = #tpu.pipeline_mode<synchronous>, transform_indices = @transform_7, window_bounds = array<i64: 128, 384>}, {pipeline_mode = #tpu.pipeline_mode<synchronous>, transform_indices = @transform_8, window_bounds = array<i64: 128, 384>}, {pipeline_mode = #tpu.pipeline_mode<synchronous>, transform_indices = @transform_9, window_bounds = array<i64: 1, 128>}, {pipeline_mode = #tpu.pipeline_mode<synchronous>, transform_indices = @transform_10, window_bounds = array<i64: 1, 128>}, {pipeline_mode = #tpu.pipeline_mode<synchronous>, transform_indices = @transform_11, window_bounds = array<i64: 1, 128>}, {pipeline_mode = #tpu.pipeline_mode<synchronous>, transform_indices = @transform_12, window_bounds = array<i64: 1, 128>}, {transform_indices = @transform_13, window_bounds = array<i64: 1, 8, 128>}, {transform_indices = @transform_14, window_bounds = array<i64: 1, 8, 128>}]} {
    %c0 = arith.constant 0 : index
    %c0_0 = arith.constant 0 : index
    %c0_1 = arith.constant 0 : index
    %0 = vector.load %arg1[%c0, %c0_0, %c0_1] : memref<1x8x128xf32, #tpu.memory_space<vmem>>, vector<1x8x128xf32>
    %1 = vector.shape_cast %0 : vector<1x8x128xf32> to vector<8x128xf32>
    %c0_2 = arith.constant 0 : index
    %c0_3 = arith.constant 0 : index
    %c0_4 = arith.constant 0 : index
    %2 = vector.load %arg2[%c0_2, %c0_3, %c0_4] : memref<1x8x128xf32, #tpu.memory_space<vmem>>, vector<1x8x128xf32>
    %3 = vector.shape_cast %2 : vector<1x8x128xf32> to vector<8x128xf32>
    %c0_5 = arith.constant 0 : index
    %c0_6 = arith.constant 0 : index
    %c0_7 = arith.constant 0 : index
    %4 = vector.load %arg3[%c0_5, %c0_6, %c0_7] : memref<1x8x128xf32, #tpu.memory_space<vmem>>, vector<1x8x128xf32>
    %5 = vector.shape_cast %4 : vector<1x8x128xf32> to vector<8x128xf32>
    %c0_8 = arith.constant 0 : index
    %c0_9 = arith.constant 0 : index
    %6 = vector.load %arg4[%c0_8, %c0_9] : memref<128x512xf32, #tpu.memory_space<vmem>>, vector<128x512xf32>
    %cst = arith.constant dense<0.000000e+00> : vector<8x512xf32>
    %7 = tpu.matmul %1, %6, %cst {dimension_numbers = #tpu.dot_dimension_numbers<[1], [0], [0], [1], [0, 0, 1, 1], [], []>} : vector<8x128xf32>, vector<128x512xf32>, vector<8x512xf32> -> vector<8x512xf32>
    %c0_10 = arith.constant 0 : index
    %c0_11 = arith.constant 0 : index
    %8 = vector.load %arg5[%c0_10, %c0_11] : memref<1x512xf32, #tpu.memory_space<vmem>>, vector<1x512xf32>
    %9 = vector.broadcast %8 : vector<1x512xf32> to vector<8x512xf32>
    %10 = arith.addf %7, %9 : vector<8x512xf32>
    %c0_12 = arith.constant 0 : index
    %c0_13 = arith.constant 0 : index
    %11 = vector.load %arg6[%c0_12, %c0_13] : memref<128x384xf32, #tpu.memory_space<vmem>>, vector<128x384xf32>
    %cst_14 = arith.constant dense<0.000000e+00> : vector<8x384xf32>
    %12 = tpu.matmul %3, %11, %cst_14 {dimension_numbers = #tpu.dot_dimension_numbers<[1], [0], [0], [1], [0, 0, 1, 1], [], []>} : vector<8x128xf32>, vector<128x384xf32>, vector<8x384xf32> -> vector<8x384xf32>
    %c0_15 = arith.constant 0 : index
    %c0_16 = arith.constant 0 : index
    %13 = vector.load %arg7[%c0_15, %c0_16] : memref<128x384xf32, #tpu.memory_space<vmem>>, vector<128x384xf32>
    %cst_17 = arith.constant dense<0.000000e+00> : vector<8x384xf32>
    %14 = tpu.matmul %5, %13, %cst_17 {dimension_numbers = #tpu.dot_dimension_numbers<[1], [0], [0], [1], [0, 0, 1, 1], [], []>} : vector<8x128xf32>, vector<128x384xf32>, vector<8x384xf32> -> vector<8x384xf32>
    %15 = vector.extract_strided_slice %10 {offsets = [0, 0], sizes = [8, 128], strides = [1, 1]} : vector<8x512xf32> to vector<8x128xf32>
    %16 = vector.extract_strided_slice %12 {offsets = [0, 0], sizes = [8, 128], strides = [1, 1]} : vector<8x384xf32> to vector<8x128xf32>
    %17 = arith.addf %15, %16 : vector<8x128xf32>
    %18 = vector.extract_strided_slice %14 {offsets = [0, 0], sizes = [8, 128], strides = [1, 1]} : vector<8x384xf32> to vector<8x128xf32>
    %19 = arith.addf %17, %18 : vector<8x128xf32>
    %20 = vector.extract_strided_slice %10 {offsets = [0, 128], sizes = [8, 128], strides = [1, 1]} : vector<8x512xf32> to vector<8x128xf32>
    %21 = vector.extract_strided_slice %14 {offsets = [0, 128], sizes = [8, 128], strides = [1, 1]} : vector<8x384xf32> to vector<8x128xf32>
    %22 = arith.addf %20, %21 : vector<8x128xf32>
    %c1_i32 = arith.constant 1 : i32
    %23 = tpu.dynamic_rotate %22 by %c1_i32 dim 0 : vector<8x128xf32>, i32 -> vector<8x128xf32>
    %24 = tpu.iota {dimensions = array<i32: 0>} : vector<8x128xi32>
    %c0_i32 = arith.constant 0 : i32
    %25 = vector.broadcast %c0_i32 : i32 to vector<8x128xi32>
    %26 = arith.cmpi eq, %24, %25 : vector<8x128xi32>
    %cst_18 = arith.constant 0.000000e+00 : f32
    %27 = vector.broadcast %cst_18 : f32 to vector<8x128xf32>
    %28 = arith.select %26, %27, %23 : vector<8x128xi1>, vector<8x128xf32>
    %29 = arith.addf %19, %28 : vector<8x128xf32>
    %30 = vector.extract_strided_slice %10 {offsets = [0, 256], sizes = [8, 128], strides = [1, 1]} : vector<8x512xf32> to vector<8x128xf32>
    %31 = vector.extract_strided_slice %12 {offsets = [0, 128], sizes = [8, 128], strides = [1, 1]} : vector<8x384xf32> to vector<8x128xf32>
    %32 = arith.addf %30, %31 : vector<8x128xf32>
    %33 = vector.extract_strided_slice %14 {offsets = [0, 256], sizes = [8, 128], strides = [1, 1]} : vector<8x384xf32> to vector<8x128xf32>
    %34 = arith.addf %32, %33 : vector<8x128xf32>
    %35 = vector.extract_strided_slice %10 {offsets = [0, 384], sizes = [8, 128], strides = [1, 1]} : vector<8x512xf32> to vector<8x128xf32>
    %36 = vector.extract_strided_slice %12 {offsets = [0, 256], sizes = [8, 128], strides = [1, 1]} : vector<8x384xf32> to vector<8x128xf32>
    %37 = arith.addf %35, %36 : vector<8x128xf32>
    %c7_i32 = arith.constant 7 : i32
    %38 = tpu.dynamic_rotate %37 by %c7_i32 dim 0 : vector<8x128xf32>, i32 -> vector<8x128xf32>
    %39 = tpu.iota {dimensions = array<i32: 0>} : vector<8x128xi32>
    %c7_i32_19 = arith.constant 7 : i32
    %40 = vector.broadcast %c7_i32_19 : i32 to vector<8x128xi32>
    %41 = arith.cmpi eq, %39, %40 : vector<8x128xi32>
    %cst_20 = arith.constant 0.000000e+00 : f32
    %42 = vector.broadcast %cst_20 : f32 to vector<8x128xf32>
    %43 = arith.select %41, %42, %38 : vector<8x128xi1>, vector<8x128xf32>
    %44 = arith.addf %34, %43 : vector<8x128xf32>
    %c0_21 = arith.constant 0 : index
    %c0_22 = arith.constant 0 : index
    %45 = vector.load %arg10[%c0_21, %c0_22] : memref<1x128xf32, #tpu.memory_space<vmem>>, vector<1x128xf32>
    %c0_23 = arith.constant 0 : index
    %c0_24 = arith.constant 0 : index
    %46 = vector.load %arg11[%c0_23, %c0_24] : memref<1x128xf32, #tpu.memory_space<vmem>>, vector<1x128xf32>
    %47 = vector.broadcast %45 : vector<1x128xf32> to vector<8x128xf32>
    %48 = arith.mulf %29, %47 : vector<8x128xf32>
    %49 = vector.broadcast %46 : vector<1x128xf32> to vector<8x128xf32>
    %50 = arith.addf %48, %49 : vector<8x128xf32>
    %cst_25 = arith.constant 0.000000e+00 : f32
    %51 = vector.broadcast %cst_25 : f32 to vector<8x128xf32>
    %52 = arith.maximumf %50, %51 : vector<8x128xf32>
    %53 = vector.broadcast %45 : vector<1x128xf32> to vector<8x128xf32>
    %54 = arith.mulf %44, %53 : vector<8x128xf32>
    %55 = vector.broadcast %46 : vector<1x128xf32> to vector<8x128xf32>
    %56 = arith.addf %54, %55 : vector<8x128xf32>
    %cst_26 = arith.constant 0.000000e+00 : f32
    %57 = vector.broadcast %cst_26 : f32 to vector<8x128xf32>
    %58 = arith.maximumf %56, %57 : vector<8x128xf32>
    %c0_27 = arith.constant 0 : index
    %c0_28 = arith.constant 0 : index
    %59 = vector.load %arg8[%c0_27, %c0_28] : memref<128x384xf32, #tpu.memory_space<vmem>>, vector<128x384xf32>
    %cst_29 = arith.constant dense<0.000000e+00> : vector<8x384xf32>
    %60 = tpu.matmul %52, %59, %cst_29 {dimension_numbers = #tpu.dot_dimension_numbers<[1], [0], [0], [1], [0, 0, 1, 1], [], []>} : vector<8x128xf32>, vector<128x384xf32>, vector<8x384xf32> -> vector<8x384xf32>
    %c0_30 = arith.constant 0 : index
    %c0_31 = arith.constant 0 : index
    %61 = vector.load %arg9[%c0_30, %c0_31] : memref<128x384xf32, #tpu.memory_space<vmem>>, vector<128x384xf32>
    %cst_32 = arith.constant dense<0.000000e+00> : vector<8x384xf32>
    %62 = tpu.matmul %58, %61, %cst_32 {dimension_numbers = #tpu.dot_dimension_numbers<[1], [0], [0], [1], [0, 0, 1, 1], [], []>} : vector<8x128xf32>, vector<128x384xf32>, vector<8x384xf32> -> vector<8x384xf32>
    %63 = vector.extract_strided_slice %60 {offsets = [0, 0], sizes = [8, 128], strides = [1, 1]} : vector<8x384xf32> to vector<8x128xf32>
    %64 = vector.extract_strided_slice %62 {offsets = [0, 0], sizes = [8, 128], strides = [1, 1]} : vector<8x384xf32> to vector<8x128xf32>
    %65 = arith.addf %63, %64 : vector<8x128xf32>
    %66 = vector.extract_strided_slice %62 {offsets = [0, 128], sizes = [8, 128], strides = [1, 1]} : vector<8x384xf32> to vector<8x128xf32>
    %c1_i32_33 = arith.constant 1 : i32
    %67 = tpu.dynamic_rotate %66 by %c1_i32_33 dim 0 : vector<8x128xf32>, i32 -> vector<8x128xf32>
    %68 = tpu.iota {dimensions = array<i32: 0>} : vector<8x128xi32>
    %c0_i32_34 = arith.constant 0 : i32
    %69 = vector.broadcast %c0_i32_34 : i32 to vector<8x128xi32>
    %70 = arith.cmpi eq, %68, %69 : vector<8x128xi32>
    %cst_35 = arith.constant 0.000000e+00 : f32
    %71 = vector.broadcast %cst_35 : f32 to vector<8x128xf32>
    %72 = arith.select %70, %71, %67 : vector<8x128xi1>, vector<8x128xf32>
    %73 = arith.addf %65, %72 : vector<8x128xf32>
    %74 = vector.extract_strided_slice %60 {offsets = [0, 128], sizes = [8, 128], strides = [1, 1]} : vector<8x384xf32> to vector<8x128xf32>
    %75 = vector.extract_strided_slice %62 {offsets = [0, 256], sizes = [8, 128], strides = [1, 1]} : vector<8x384xf32> to vector<8x128xf32>
    %76 = arith.addf %74, %75 : vector<8x128xf32>
    %77 = vector.extract_strided_slice %60 {offsets = [0, 256], sizes = [8, 128], strides = [1, 1]} : vector<8x384xf32> to vector<8x128xf32>
    %c7_i32_36 = arith.constant 7 : i32
    %78 = tpu.dynamic_rotate %77 by %c7_i32_36 dim 0 : vector<8x128xf32>, i32 -> vector<8x128xf32>
    %79 = tpu.iota {dimensions = array<i32: 0>} : vector<8x128xi32>
    %c7_i32_37 = arith.constant 7 : i32
    %80 = vector.broadcast %c7_i32_37 : i32 to vector<8x128xi32>
    %81 = arith.cmpi eq, %79, %80 : vector<8x128xi32>
    %cst_38 = arith.constant 0.000000e+00 : f32
    %82 = vector.broadcast %cst_38 : f32 to vector<8x128xf32>
    %83 = arith.select %81, %82, %78 : vector<8x128xi1>, vector<8x128xf32>
    %84 = arith.addf %76, %83 : vector<8x128xf32>
    %c0_39 = arith.constant 0 : index
    %c0_40 = arith.constant 0 : index
    %85 = vector.load %arg12[%c0_39, %c0_40] : memref<1x128xf32, #tpu.memory_space<vmem>>, vector<1x128xf32>
    %c0_41 = arith.constant 0 : index
    %c0_42 = arith.constant 0 : index
    %86 = vector.load %arg13[%c0_41, %c0_42] : memref<1x128xf32, #tpu.memory_space<vmem>>, vector<1x128xf32>
    %87 = vector.broadcast %85 : vector<1x128xf32> to vector<8x128xf32>
    %88 = arith.mulf %73, %87 : vector<8x128xf32>
    %89 = vector.broadcast %86 : vector<1x128xf32> to vector<8x128xf32>
    %90 = arith.addf %88, %89 : vector<8x128xf32>
    %cst_43 = arith.constant 0.000000e+00 : f32
    %91 = vector.broadcast %cst_43 : f32 to vector<8x128xf32>
    %92 = arith.maximumf %90, %91 : vector<8x128xf32>
    %c0_44 = arith.constant 0 : index
    %c0_45 = arith.constant 0 : index
    %c0_46 = arith.constant 0 : index
    %93 = vector.load %arg14[%c0_44, %c0_45, %c0_46] : memref<1x8x128xf32, #tpu.memory_space<vmem>>, vector<1x8x128xf32>
    %94 = vector.shape_cast %93 : vector<1x8x128xf32> to vector<8x128xf32>
    %95 = vector.shape_cast %92 : vector<8x128xf32> to vector<1x8x128xf32>
    tpu.vector_store %arg14[%c0_44, %c0_45, %c0_46], %95 {strides = array<i32>} : memref<1x8x128xf32, #tpu.memory_space<vmem>>, vector<1x8x128xf32>,
    %96 = vector.broadcast %85 : vector<1x128xf32> to vector<8x128xf32>
    %97 = arith.mulf %84, %96 : vector<8x128xf32>
    %98 = vector.broadcast %86 : vector<1x128xf32> to vector<8x128xf32>
    %99 = arith.addf %97, %98 : vector<8x128xf32>
    %cst_47 = arith.constant 0.000000e+00 : f32
    %100 = vector.broadcast %cst_47 : f32 to vector<8x128xf32>
    %101 = arith.maximumf %99, %100 : vector<8x128xf32>
    %c0_48 = arith.constant 0 : index
    %c0_49 = arith.constant 0 : index
    %c0_50 = arith.constant 0 : index
    %102 = vector.load %arg15[%c0_48, %c0_49, %c0_50] : memref<1x8x128xf32, #tpu.memory_space<vmem>>, vector<1x8x128xf32>
    %103 = vector.shape_cast %102 : vector<1x8x128xf32> to vector<8x128xf32>
    %104 = vector.shape_cast %101 : vector<8x128xf32> to vector<1x8x128xf32>
    tpu.vector_store %arg15[%c0_48, %c0_49, %c0_50], %104 {strides = array<i32>} : memref<1x8x128xf32, #tpu.memory_space<vmem>>, vector<1x8x128xf32>,
    return
  }
  func.func @transform_0(%arg0: i32) -> (i32, i32, i32) {
    %c0_i32 = arith.constant 0 : i32
    %c0_i32_0 = arith.constant 0 : i32
    %c0_i32_1 = arith.constant 0 : i32
    return %arg0, %c0_i32, %c0_i32_0 : i32, i32, i32
  }
  func.func @transform_1(%arg0: i32) -> (i32, i32, i32) {
    %c0_i32 = arith.constant 0 : i32
    %c0_i32_0 = arith.constant 0 : i32
    %c0_i32_1 = arith.constant 0 : i32
    return %arg0, %c0_i32, %c0_i32_0 : i32, i32, i32
  }
  func.func @transform_2(%arg0: i32) -> (i32, i32, i32) {
    %c0_i32 = arith.constant 0 : i32
    %c0_i32_0 = arith.constant 0 : i32
    %c0_i32_1 = arith.constant 0 : i32
    return %arg0, %c0_i32, %c0_i32_0 : i32, i32, i32
  }
  func.func @transform_3(%arg0: i32) -> (i32, i32) {
    %c0_i32 = arith.constant 0 : i32
    %c0_i32_0 = arith.constant 0 : i32
    %c0_i32_1 = arith.constant 0 : i32
    return %c0_i32, %c0_i32_0 : i32, i32
  }
  func.func @transform_4(%arg0: i32) -> (i32, i32) {
    %c0_i32 = arith.constant 0 : i32
    %c0_i32_0 = arith.constant 0 : i32
    %c0_i32_1 = arith.constant 0 : i32
    return %c0_i32, %c0_i32_0 : i32, i32
  }
  func.func @transform_5(%arg0: i32) -> (i32, i32) {
    %c0_i32 = arith.constant 0 : i32
    %c0_i32_0 = arith.constant 0 : i32
    %c0_i32_1 = arith.constant 0 : i32
    return %c0_i32, %c0_i32_0 : i32, i32
  }
  func.func @transform_6(%arg0: i32) -> (i32, i32) {
    %c0_i32 = arith.constant 0 : i32
    %c0_i32_0 = arith.constant 0 : i32
    %c0_i32_1 = arith.constant 0 : i32
    return %c0_i32, %c0_i32_0 : i32, i32
  }
  func.func @transform_7(%arg0: i32) -> (i32, i32) {
    %c0_i32 = arith.constant 0 : i32
    %c0_i32_0 = arith.constant 0 : i32
    %c0_i32_1 = arith.constant 0 : i32
    return %c0_i32, %c0_i32_0 : i32, i32
  }
  func.func @transform_8(%arg0: i32) -> (i32, i32) {
    %c0_i32 = arith.constant 0 : i32
    %c0_i32_0 = arith.constant 0 : i32
    %c0_i32_1 = arith.constant 0 : i32
    return %c0_i32, %c0_i32_0 : i32, i32
  }
  func.func @transform_9(%arg0: i32) -> (i32, i32) {
    %c0_i32 = arith.constant 0 : i32
    %c0_i32_0 = arith.constant 0 : i32
    %c0_i32_1 = arith.constant 0 : i32
    return %c0_i32, %c0_i32_0 : i32, i32
  }
  func.func @transform_10(%arg0: i32) -> (i32, i32) {
    %c0_i32 = arith.constant 0 : i32
    %c0_i32_0 = arith.constant 0 : i32
    %c0_i32_1 = arith.constant 0 : i32
    return %c0_i32, %c0_i32_0 : i32, i32
  }
  func.func @transform_11(%arg0: i32) -> (i32, i32) {
    %c0_i32 = arith.constant 0 : i32
    %c0_i32_0 = arith.constant 0 : i32
    %c0_i32_1 = arith.constant 0 : i32
    return %c0_i32, %c0_i32_0 : i32, i32
  }
  func.func @transform_12(%arg0: i32) -> (i32, i32) {
    %c0_i32 = arith.constant 0 : i32
    %c0_i32_0 = arith.constant 0 : i32
    %c0_i32_1 = arith.constant 0 : i32
    return %c0_i32, %c0_i32_0 : i32, i32
  }
  func.func @transform_13(%arg0: i32) -> (i32, i32, i32) {
    %c0_i32 = arith.constant 0 : i32
    %c0_i32_0 = arith.constant 0 : i32
    %c0_i32_1 = arith.constant 0 : i32
    return %arg0, %c0_i32, %c0_i32_0 : i32, i32, i32
  }
  func.func @transform_14(%arg0: i32) -> (i32, i32, i32) {
    %c0_i32 = arith.constant 0 : i32
    %c0_i32_0 = arith.constant 0 : i32
    %c0_i32_1 = arith.constant 0 : i32
    return %arg0, %c0_i32, %c0_i32_0 : i32, i32, i32
  }
}

</mosaic_0001>

<llo_original>
// kernel: upsample_forward.1
$region0: #{upsample_forward.1}
  #allocation0 [shape = 'u32[]', space=smem, size = 0x4, offset = 0x4, fixed_abs, tag = 'smem constant byte address 0x4 - core index']
  #allocation1 [shape = 'u32[144,128]{1,0:T(1,128)}', space=vmem, size = 0x12000, scoped, tag = 'internal scratch']
  %s0 = inlined_call_operand.hbm [shape: f32[2,8,128], index: 0, kind: input, shape index: {}]
  %s1 = inlined_call_operand.hbm [shape: f32[2,8,128], index: 1, kind: input, shape index: {}]
  %s2 = inlined_call_operand.hbm [shape: f32[2,8,128], index: 2, kind: input, shape index: {}]
  %s3 = inlined_call_operand.hbm [shape: f32[128,512], index: 3, kind: input, shape index: {}]
  %s4 = inlined_call_operand.hbm [shape: f32[1,512], index: 4, kind: input, shape index: {}]
  %s5 = inlined_call_operand.hbm [shape: f32[128,384], index: 5, kind: input, shape index: {}]
  %s6 = inlined_call_operand.hbm [shape: f32[128,384], index: 6, kind: input, shape index: {}]
  %s7 = inlined_call_operand.hbm [shape: f32[128,384], index: 7, kind: input, shape index: {}]
  %s8 = inlined_call_operand.hbm [shape: f32[128,384], index: 8, kind: input, shape index: {}]
  %s9 = inlined_call_operand.hbm [shape: f32[1,128], index: 9, kind: input, shape index: {}]
  %s10 = inlined_call_operand.hbm [shape: f32[1,128], index: 10, kind: input, shape index: {}]
  %s11 = inlined_call_operand.hbm [shape: f32[1,128], index: 11, kind: input, shape index: {}]
  %s12 = inlined_call_operand.hbm [shape: f32[1,128], index: 12, kind: input, shape index: {}]
  %s13 = inlined_call_operand.hbm [shape: f32[2,8,128], index: 13, kind: output, shape index: {0}]
  %s14 = inlined_call_operand.hbm [shape: f32[2,8,128], index: 14, kind: output, shape index: {1}]
  %15 = xla_tuple %s13, %s14
  %s16 = sld [smem:[#allocation0]]
  $region145: #{upsample_forward.1} parent=0
    _
  %s18 = ssub.s32 1, %s16
  %s19 = scalar_select 0, %s18, %s16
  $region1: #{upsample_forward.1} parent=0
    #allocation2 [shape = 'u8[8192]{0}', space=vmem, size = 0x2000, scoped, tag = 'input window, operand 0']
    #allocation3 [shape = 's32[2]{0}', space=sflag, size = 0x8, scoped, tag = 'scoped memory for upsample_forward.1']
    #allocation4 [shape = 's32[2]{0}', space=sflag, size = 0x8, scoped, tag = 'scoped memory for upsample_forward.1']
    #allocation5 [shape = 'u8[8192]{0}', space=vmem, size = 0x2000, scoped, tag = 'input window, operand 1']
    #allocation6 [shape = 's32[2]{0}', space=sflag, size = 0x8, scoped, tag = 'scoped memory for upsample_forward.1']
    #allocation7 [shape = 'u8[8192]{0}', space=vmem, size = 0x2000, scoped, tag = 'input window, operand 2']
    #allocation8 [shape = 'u8[262144]{0}', space=vmem, size = 0x40000, scoped, tag = 'input window, operand 3, single buffered']
    #allocation9 [shape = 's32[1]{0}', space=sflag, size = 0x4, scoped, tag = 'scoped memory for upsample_forward.1']
    #allocation10 [shape = 'u8[2048]{0}', space=vmem, size = 0x800, scoped, tag = 'input window, operand 4, single buffered']
    #allocation11 [shape = 'u8[196608]{0}', space=vmem, size = 0x30000, scoped, tag = 'input window, operand 5, single buffered']
    #allocation12 [shape = 's32[1]{0}', space=sflag, size = 0x4, scoped, tag = 'scoped memory for upsample_forward.1']
    #allocation13 [shape = 'u8[196608]{0}', space=vmem, size = 0x30000, scoped, tag = 'input window, operand 6, single buffered']
    #allocation14 [shape = 'u8[196608]{0}', space=vmem, size = 0x30000, scoped, tag = 'input window, operand 7, single buffered']
    #allocation15 [shape = 's32[1]{0}', space=sflag, size = 0x4, scoped, tag = 'scoped memory for upsample_forward.1']
    #allocation16 [shape = 'u8[196608]{0}', space=vmem, size = 0x30000, scoped, tag = 'input window, operand 8, single buffered']
    #allocation17 [shape = 'u8[512]{0}', space=vmem, size = 0x400, scoped, tag = 'input window, operand 9, single buffered']
    #allocation18 [shape = 's32[1]{0}', space=sflag, size = 0x4, scoped, tag = 'scoped memory for upsample_forward.1']
    #allocation19 [shape = 'u8[512]{0}', space=vmem, size = 0x400, scoped, tag = 'input window, operand 10, single buffered']
    #allocation20 [shape = 'u8[512]{0}', space=vmem, size = 0x400, scoped, tag = 'input window, operand 11, single buffered']
    #allocation21 [shape = 's32[1]{0}', space=sflag, size = 0x4, scoped, tag = 'scoped memory for upsample_forward.1']
    #allocation22 [shape = 'u8[512]{0}', space=vmem, size = 0x400, scoped, tag = 'input window, operand 12, single buffered']
    #allocation23 [shape = 'u8[8192]{0}', space=vmem, size = 0x2000, scoped, tag = 'output window, operand 0']
    #allocation24 [shape = 'u8[8192]{0}', space=vmem, size = 0x2000, scoped, tag = 'output window, operand 1']
    #allocation25 [shape = 's32[2]{0}', space=sflag, size = 0x8, scoped, tag = 'scoped memory for upsample_forward.1']
    %20 = vsyncpa [#allocation3], 0
    %s21 = scalar_lea.sflag [#allocation3], 1
    %22 = vsyncpa %s21, 0
    %23 = vsyncpa [#allocation6], 0
    %s24 = scalar_lea.sflag [#allocation6], 1
    %25 = vsyncpa %s24, 0
    %26 = vsyncpa [#allocation9], 0
    %27 = vsyncpa [#allocation12], 0
    %28 = vsyncpa [#allocation15], 0
    %29 = vsyncpa [#allocation18], 0
    %30 = vsyncpa [#allocation21], 0
    %31 = vsyncpa [#allocation4], 0
    %s32 = scalar_lea.sflag [#allocation4], 1
    %33 = vsyncpa %s32, 0
    %34 = vsyncpa [#allocation25], 0
    %s35 = scalar_lea.sflag [#allocation25], 1
    %36 = vsyncpa %s35, 0
    loop: start=0, step=1, limit=4
    $region2: #{upsample_forward.1} parent=1 // loop_pre_header
      _
    $region3: #{upsample_forward.1} parent=1 // loop_header
      %s38 = sphi 0, %s42
      %p39 = scmp.ge.s32.totalorder %s38, 4
      %s48 = sphi 0, %s50
      %s51 = sphi 0, %s48
      %s52 = sphi 0, %s51
      %s68 = sphi 0, %s52
      %s74 = sphi 0, %s76
      %s77 = sphi 0, %s74
      %s78 = sphi 0, %s77
      %s94 = sphi 0, %s78
      %s100 = sphi 0, %s102
      %s103 = sphi 0, %s100
      %s104 = sphi 0, %s103
      %s120 = sphi 0, %s104
      %s124 = sphi 0, %s124
      %s126 = sphi 0, %s124
      %s127 = sphi 0, %s126
      %s141 = sphi 0, %s127
      %s145 = sphi 0, %s145
      %s147 = sphi 0, %s145
      %s148 = sphi 0, %s147
      %s162 = sphi 0, %s148
      %s166 = sphi 0, %s166
      %s168 = sphi 0, %s166
      %s169 = sphi 0, %s168
      %s183 = sphi 0, %s169
      %s187 = sphi 0, %s187
      %s189 = sphi 0, %s187
      %s190 = sphi 0, %s189
      %s204 = sphi 0, %s190
      %s208 = sphi 0, %s208
      %s210 = sphi 0, %s208
      %s211 = sphi 0, %s210
      %s225 = sphi 0, %s211
      %s229 = sphi 0, %s229
      %s231 = sphi 0, %s229
      %s232 = sphi 0, %s231
      %s246 = sphi 0, %s232
      %s250 = sphi 0, %s250
      %s252 = sphi 0, %s250
      %s253 = sphi 0, %s252
      %s267 = sphi 0, %s253
      %s271 = sphi 0, %s271
      %s273 = sphi 0, %s271
      %s274 = sphi 0, %s273
      %s288 = sphi 0, %s274
      %s292 = sphi 0, %s292
      %s294 = sphi 0, %s292
      %s295 = sphi 0, %s294
      %s309 = sphi 0, %s295
      %s313 = sphi 0, %s313
      %s315 = sphi 0, %s313
      %s316 = sphi 0, %s315
      %s330 = sphi 0, %s316
      %s336 = sphi 0, %s338
      %s339 = sphi 0, %s336
      %s340 = sphi 0, %s339
      %s356 = sphi 0, %s340
      %s362 = sphi 0, %s364
      %s365 = sphi 0, %s362
      %s366 = sphi 0, %s365
      %s382 = sphi 0, %s366
    $region4: #{upsample_forward.1} parent=1 // loop_header_branch
      %41 = sbr.rel (%p39) target = $region8
    $region5: #{upsample_forward.1} parent=1 // loop_body
      %s43 = ssub.s32 %s38, 1
      %s44 = ssub.s32 %s38, 2
      %s45 = sadd.s32 %s38, 1
      %s46 = ssub.s32 %s38, %s45
      %p47 = scmp.eq.s32.totalorder %s46, 0
      %s49 = sadd.s32 %s48, 1
      %s50 = scalar_select %p47, %s48, %s49
      %p53 = pneg %p47
      %p54 = scmp.eq.s32.totalorder %s38, 1
      %p55 = por %p53, %p54
      %p56 = scmp.ne.s32.totalorder %s48, %s51
      %p57 = scmp.eq.s32.totalorder %s38, 0
      %p58 = por %p56, %p57
      %p59 = scmp.ne.s32.totalorder %s48, %s51
      %p60 = scmp.eq.s32.totalorder %s43, 1
      %p61 = por %p59, %p60
      %p62 = scmp.ne.s32.totalorder %s51, %s52
      %p63 = scmp.eq.s32.totalorder %s43, 0
      %p64 = por %p62, %p63
      %p65 = scmp.ne.s32.totalorder %s51, %s52
      %p66 = scmp.eq.s32.totalorder %s44, 1
      %p67 = por %p65, %p66
      %p69 = scmp.ne.s32.totalorder %s52, %s68
      %p70 = scmp.eq.s32.totalorder %s44, 0
      %p71 = por %p69, %p70
      %s72 = ssub.s32 %s38, %s45
      %p73 = scmp.eq.s32.totalorder %s72, 0
      %s75 = sadd.s32 %s74, 1
      %s76 = scalar_select %p73, %s74, %s75
      %p79 = pneg %p73
      %p80 = scmp.eq.s32.totalorder %s38, 1
      %p81 = por %p79, %p80
      %p82 = scmp.ne.s32.totalorder %s74, %s77
      %p83 = scmp.eq.s32.totalorder %s38, 0
      %p84 = por %p82, %p83
      %p85 = scmp.ne.s32.totalorder %s74, %s77
      %p86 = scmp.eq.s32.totalorder %s43, 1
      %p87 = por %p85, %p86
      %p88 = scmp.ne.s32.totalorder %s77, %s78
      %p89 = scmp.eq.s32.totalorder %s43, 0
      %p90 = por %p88, %p89
      %p91 = scmp.ne.s32.totalorder %s77, %s78
      %p92 = scmp.eq.s32.totalorder %s44, 1
      %p93 = por %p91, %p92
      %p95 = scmp.ne.s32.totalorder %s78, %s94
      %p96 = scmp.eq.s32.totalorder %s44, 0
      %p97 = por %p95, %p96
      %s98 = ssub.s32 %s38, %s45
      %p99 = scmp.eq.s32.totalorder %s98, 0
      %s101 = sadd.s32 %s100, 1
      %s102 = scalar_select %p99, %s100, %s101
      %p105 = pneg %p99
      %p106 = scmp.eq.s32.totalorder %s38, 1
      %p107 = por %p105, %p106
      %p108 = scmp.ne.s32.totalorder %s100, %s103
      %p109 = scmp.eq.s32.totalorder %s38, 0
      %p110 = por %p108, %p109
      %p111 = scmp.ne.s32.totalorder %s100, %s103
      %p112 = scmp.eq.s32.totalorder %s43, 1
      %p113 = por %p111, %p112
      %p114 = scmp.ne.s32.totalorder %s103, %s104
      %p115 = scmp.eq.s32.totalorder %s43, 0
      %p116 = por %p114, %p115
      %p117 = scmp.ne.s32.totalorder %s103, %s104
      %p118 = scmp.eq.s32.totalorder %s44, 1
      %p119 = por %p117, %p118
      %p121 = scmp.ne.s32.totalorder %s104, %s120
      %p122 = scmp.eq.s32.totalorder %s44, 0
      %p123 = por %p121, %p122
      %s125 = sadd.s32 %s124, 1
      %p128 = scmp.eq.s32.totalorder %s38, 1
      %p129 = scmp.ne.s32.totalorder %s124, %s126
      %p130 = scmp.eq.s32.totalorder %s38, 0
      %p131 = por %p129, %p130
      %p132 = scmp.ne.s32.totalorder %s124, %s126
      %p133 = scmp.eq.s32.totalorder %s43, 1
      %p134 = por %p132, %p133
      %p135 = scmp.ne.s32.totalorder %s126, %s127
      %p136 = scmp.eq.s32.totalorder %s43, 0
      %p137 = por %p135, %p136
      %p138 = scmp.ne.s32.totalorder %s126, %s127
      %p139 = scmp.eq.s32.totalorder %s44, 1
      %p140 = por %p138, %p139
      %p142 = scmp.ne.s32.totalorder %s127, %s141
      %p143 = scmp.eq.s32.totalorder %s44, 0
      %p144 = por %p142, %p143
      %s146 = sadd.s32 %s145, 1
      %p149 = scmp.eq.s32.totalorder %s38, 1
      %p150 = scmp.ne.s32.totalorder %s145, %s147
      %p151 = scmp.eq.s32.totalorder %s38, 0
      %p152 = por %p150, %p151
      %p153 = scmp.ne.s32.totalorder %s145, %s147
      %p154 = scmp.eq.s32.totalorder %s43, 1
      %p155 = por %p153, %p154
      %p156 = scmp.ne.s32.totalorder %s147, %s148
      %p157 = scmp.eq.s32.totalorder %s43, 0
      %p158 = por %p156, %p157
      %p159 = scmp.ne.s32.totalorder %s147, %s148
      %p160 = scmp.eq.s32.totalorder %s44, 1
      %p161 = por %p159, %p160
      %p163 = scmp.ne.s32.totalorder %s148, %s162
      %p164 = scmp.eq.s32.totalorder %s44, 0
      %p165 = por %p163, %p164
      %s167 = sadd.s32 %s166, 1
      %p170 = scmp.eq.s32.totalorder %s38, 1
      %p171 = scmp.ne.s32.totalorder %s166, %s168
      %p172 = scmp.eq.s32.totalorder %s38, 0
      %p173 = por %p171, %p172
      %p174 = scmp.ne.s32.totalorder %s166, %s168
      %p175 = scmp.eq.s32.totalorder %s43, 1
      %p176 = por %p174, %p175
      %p177 = scmp.ne.s32.totalorder %s168, %s169
      %p178 = scmp.eq.s32.totalorder %s43, 0
      %p179 = por %p177, %p178
      %p180 = scmp.ne.s32.totalorder %s168, %s169
      %p181 = scmp.eq.s32.totalorder %s44, 1
      %p182 = por %p180, %p181
      %p184 = scmp.ne.s32.totalorder %s169, %s183
      %p185 = scmp.eq.s32.totalorder %s44, 0
      %p186 = por %p184, %p185
      %s188 = sadd.s32 %s187, 1
      %p191 = scmp.eq.s32.totalorder %s38, 1
      %p192 = scmp.ne.s32.totalorder %s187, %s189
      %p193 = scmp.eq.s32.totalorder %s38, 0
      %p194 = por %p192, %p193
      %p195 = scmp.ne.s32.totalorder %s187, %s189
      %p196 = scmp.eq.s32.totalorder %s43, 1
      %p197 = por %p195, %p196
      %p198 = scmp.ne.s32.totalorder %s189, %s190
      %p199 = scmp.eq.s32.totalorder %s43, 0
      %p200 = por %p198, %p199
      %p201 = scmp.ne.s32.totalorder %s189, %s190
      %p202 = scmp.eq.s32.totalorder %s44, 1
      %p203 = por %p201, %p202
      %p205 = scmp.ne.s32.totalorder %s190, %s204
      %p206 = scmp.eq.s32.totalorder %s44, 0
      %p207 = por %p205, %p206
      %s209 = sadd.s32 %s208, 1
      %p212 = scmp.eq.s32.totalorder %s38, 1
      %p213 = scmp.ne.s32.totalorder %s208, %s210
      %p214 = scmp.eq.s32.totalorder %s38, 0
      %p215 = por %p213, %p214
      %p216 = scmp.ne.s32.totalorder %s208, %s210
      %p217 = scmp.eq.s32.totalorder %s43, 1
      %p218 = por %p216, %p217
      %p219 = scmp.ne.s32.totalorder %s210, %s211
      %p220 = scmp.eq.s32.totalorder %s43, 0
      %p221 = por %p219, %p220
      %p222 = scmp.ne.s32.totalorder %s210, %s211
      %p223 = scmp.eq.s32.totalorder %s44, 1
      %p224 = por %p222, %p223
      %p226 = scmp.ne.s32.totalorder %s211, %s225
      %p227 = scmp.eq.s32.totalorder %s44, 0
      %p228 = por %p226, %p227
      %s230 = sadd.s32 %s229, 1
      %p233 = scmp.eq.s32.totalorder %s38, 1
      %p234 = scmp.ne.s32.totalorder %s229, %s231
      %p235 = scmp.eq.s32.totalorder %s38, 0
      %p236 = por %p234, %p235
      %p237 = scmp.ne.s32.totalorder %s229, %s231
      %p238 = scmp.eq.s32.totalorder %s43, 1
      %p239 = por %p237, %p238
      %p240 = scmp.ne.s32.totalorder %s231, %s232
      %p241 = scmp.eq.s32.totalorder %s43, 0
      %p242 = por %p240, %p241
      %p243 = scmp.ne.s32.totalorder %s231, %s232
      %p244 = scmp.eq.s32.totalorder %s44, 1
      %p245 = por %p243, %p244
      %p247 = scmp.ne.s32.totalorder %s232, %s246
      %p248 = scmp.eq.s32.totalorder %s44, 0
      %p249 = por %p247, %p248
      %s251 = sadd.s32 %s250, 1
      %p254 = scmp.eq.s32.totalorder %s38, 1
      %p255 = scmp.ne.s32.totalorder %s250, %s252
      %p256 = scmp.eq.s32.totalorder %s38, 0
      %p257 = por %p255, %p256
      %p258 = scmp.ne.s32.totalorder %s250, %s252
      %p259 = scmp.eq.s32.totalorder %s43, 1
      %p260 = por %p258, %p259
      %p261 = scmp.ne.s32.totalorder %s252, %s253
      %p262 = scmp.eq.s32.totalorder %s43, 0
      %p263 = por %p261, %p262
      %p264 = scmp.ne.s32.totalorder %s252, %s253
      %p265 = scmp.eq.s32.totalorder %s44, 1
      %p266 = por %p264, %p265
      %p268 = scmp.ne.s32.totalorder %s253, %s267
      %p269 = scmp.eq.s32.totalorder %s44, 0
      %p270 = por %p268, %p269
      %s272 = sadd.s32 %s271, 1
      %p275 = scmp.eq.s32.totalorder %s38, 1
      %p276 = scmp.ne.s32.totalorder %s271, %s273
      %p277 = scmp.eq.s32.totalorder %s38, 0
      %p278 = por %p276, %p277
      %p279 = scmp.ne.s32.totalorder %s271, %s273
      %p280 = scmp.eq.s32.totalorder %s43, 1
      %p281 = por %p279, %p280
      %p282 = scmp.ne.s32.totalorder %s273, %s274
      %p283 = scmp.eq.s32.totalorder %s43, 0
      %p284 = por %p282, %p283
      %p285 = scmp.ne.s32.totalorder %s273, %s274
      %p286 = scmp.eq.s32.totalorder %s44, 1
      %p287 = por %p285, %p286
      %p289 = scmp.ne.s32.totalorder %s274, %s288
      %p290 = scmp.eq.s32.totalorder %s44, 0
      %p291 = por %p289, %p290
      %s293 = sadd.s32 %s292, 1
      %p296 = scmp.eq.s32.totalorder %s38, 1
      %p297 = scmp.ne.s32.totalorder %s292, %s294
      %p298 = scmp.eq.s32.totalorder %s38, 0
      %p299 = por %p297, %p298
      %p300 = scmp.ne.s32.totalorder %s292, %s294
      %p301 = scmp.eq.s32.totalorder %s43, 1
      %p302 = por %p300, %p301
      %p303 = scmp.ne.s32.totalorder %s294, %s295
      %p304 = scmp.eq.s32.totalorder %s43, 0
      %p305 = por %p303, %p304
      %p306 = scmp.ne.s32.totalorder %s294, %s295
      %p307 = scmp.eq.s32.totalorder %s44, 1
      %p308 = por %p306, %p307
      %p310 = scmp.ne.s32.totalorder %s295, %s309
      %p311 = scmp.eq.s32.totalorder %s44, 0
      %p312 = por %p310, %p311
      %s314 = sadd.s32 %s313, 1
      %p317 = scmp.eq.s32.totalorder %s38, 1
      %p318 = scmp.ne.s32.totalorder %s313, %s315
      %p319 = scmp.eq.s32.totalorder %s38, 0
      %p320 = por %p318, %p319
      %p321 = scmp.ne.s32.totalorder %s313, %s315
      %p322 = scmp.eq.s32.totalorder %s43, 1
      %p323 = por %p321, %p322
      %p324 = scmp.ne.s32.totalorder %s315, %s316
      %p325 = scmp.eq.s32.totalorder %s43, 0
      %p326 = por %p324, %p325
      %p327 = scmp.ne.s32.totalorder %s315, %s316
      %p328 = scmp.eq.s32.totalorder %s44, 1
      %p329 = por %p327, %p328
      %p331 = scmp.ne.s32.totalorder %s316, %s330
      %p332 = scmp.eq.s32.totalorder %s44, 0
      %p333 = por %p331, %p332
      %s334 = ssub.s32 %s38, %s45
      %p335 = scmp.eq.s32.totalorder %s334, 0
      %s337 = sadd.s32 %s336, 1
      %s338 = scalar_select %p335, %s336, %s337
      %p341 = pneg %p335
      %p342 = scmp.eq.s32.totalorder %s38, 1
      %p343 = por %p341, %p342
      %p344 = scmp.ne.s32.totalorder %s336, %s339
      %p345 = scmp.eq.s32.totalorder %s38, 0
      %p346 = por %p344, %p345
      %p347 = scmp.ne.s32.totalorder %s336, %s339
      %p348 = scmp.eq.s32.totalorder %s43, 1
      %p349 = por %p347, %p348
      %p350 = scmp.ne.s32.totalorder %s339, %s340
      %p351 = scmp.eq.s32.totalorder %s43, 0
      %p352 = por %p350, %p351
      %p353 = scmp.ne.s32.totalorder %s339, %s340
      %p354 = scmp.eq.s32.totalorder %s44, 1
      %p355 = por %p353, %p354
      %p357 = scmp.ne.s32.totalorder %s340, %s356
      %p358 = scmp.eq.s32.totalorder %s44, 0
      %p359 = por %p357, %p358
      %s360 = ssub.s32 %s38, %s45
      %p361 = scmp.eq.s32.totalorder %s360, 0
      %s363 = sadd.s32 %s362, 1
      %s364 = scalar_select %p361, %s362, %s363
      %p367 = pneg %p361
      %p368 = scmp.eq.s32.totalorder %s38, 1
      %p369 = por %p367, %p368
      %p370 = scmp.ne.s32.totalorder %s362, %s365
      %p371 = scmp.eq.s32.totalorder %s38, 0
      %p372 = por %p370, %p371
      %p373 = scmp.ne.s32.totalorder %s362, %s365
      %p374 = scmp.eq.s32.totalorder %s43, 1
      %p375 = por %p373, %p374
      %p376 = scmp.ne.s32.totalorder %s365, %s366
      %p377 = scmp.eq.s32.totalorder %s43, 0
      %p378 = por %p376, %p377
      %p379 = scmp.ne.s32.totalorder %s365, %s366
      %p380 = scmp.eq.s32.totalorder %s44, 1
      %p381 = por %p379, %p380
      %p383 = scmp.ne.s32.totalorder %s366, %s382
      %p384 = scmp.eq.s32.totalorder %s44, 0
      %p385 = por %p383, %p384
      %p386 = scmp.le.s32.totalorder 1, %s38
      %p387 = scmp.lt.s32.totalorder %s38, 3
      %p388 = pnand %p386, %p387
      %p389 = pneg %p388
      // Predicated region
      $region9: #{upsample_forward.1} parent=5 // pred_check
        _
      $region10: #{upsample_forward.1} parent=5 // pred_check_branch
        %391 = sbr.rel (%p388) target = $region12
      $region11: #{upsample_forward.1} parent=5 // pred_region
        %s392 = ssub.s32 %s38, 1
        // Predicated region
        $region13: #{upsample_forward.1} parent=11 // pred_check
          %p393 = pneg %p137
        $region14: #{upsample_forward.1} parent=11 // pred_check_branch
          %395 = sbr.rel (%p393) target = $region16
        $region15: #{upsample_forward.1} parent=11 // pred_region
          %s397 = ssub.s32 8192, 8192
          %398 = vsyncadd [#allocation9], %s397
          %s399 = sshll.u32 [#allocation8], 4
          %s400 = int_to_ptr.vmem [resolvable:$true] %s399
          %405 = dma.hbm_to_vmem [thread:$0]  %s3, 8192, %s400, [#allocation9], 512, 512, 32
        $region16: #{upsample_forward.1} parent=11 // pred_fallthru
          _
        // Predicated region
        $region17: #{upsample_forward.1} parent=11 // pred_check
          %p406 = pneg %p158
        $region18: #{upsample_forward.1} parent=11 // pred_check_branch
          %408 = sbr.rel (%p406) target = $region20
        $region19: #{upsample_forward.1} parent=11 // pred_region
          %s410 = ssub.s32 64, 64
          %411 = vsyncadd [#allocation9], %s410
          %s413 = sshll.u32 [#allocation10], 4
          %s414 = int_to_ptr.vmem [resolvable:$true] %s413
          %416 = dma.hbm_to_vmem [thread:$0]  %s4, 64, %s414, [#allocation9]
        $region20: #{upsample_forward.1} parent=11 // pred_fallthru
          _
        // Predicated region
        $region21: #{upsample_forward.1} parent=11 // pred_check
          %p417 = pneg %p179
        $region22: #{upsample_forward.1} parent=11 // pred_check_branch
          %419 = sbr.rel (%p417) target = $region24
        $region23: #{upsample_forward.1} parent=11 // pred_region
          %s421 = ssub.s32 6144, 6144
          %422 = vsyncadd [#allocation12], %s421
          %s423 = sshll.u32 [#allocation11], 4
          %s424 = int_to_ptr.vmem [resolvable:$true] %s423
          %429 = dma.hbm_to_vmem [thread:$0]  %s5, 6144, %s424, [#allocation12], 384, 384, 24
        $region24: #{upsample_forward.1} parent=11 // pred_fallthru
          _
        // Predicated region
        $region25: #{upsample_forward.1} parent=11 // pred_check
          %p430 = pneg %p200
        $region26: #{upsample_forward.1} parent=11 // pred_check_branch
          %432 = sbr.rel (%p430) target = $region28
        $region27: #{upsample_forward.1} parent=11 // pred_region
          %s434 = ssub.s32 6144, 6144
          %435 = vsyncadd [#allocation12], %s434
          %s436 = sshll.u32 [#allocation13], 4
          %s437 = int_to_ptr.vmem [resolvable:$true] %s436
          %442 = dma.hbm_to_vmem [thread:$0]  %s6, 6144, %s437, [#allocation12], 384, 384, 24
        $region28: #{upsample_forward.1} parent=11 // pred_fallthru
          _
        // Predicated region
        $region29: #{upsample_forward.1} parent=11 // pred_check
          %p443 = pneg %p221
        $region30: #{upsample_forward.1} parent=11 // pred_check_branch
          %445 = sbr.rel (%p443) target = $region32
        $region31: #{upsample_forward.1} parent=11 // pred_region
          %s447 = ssub.s32 6144, 6144
          %448 = vsyncadd [#allocation15], %s447
          %s449 = sshll.u32 [#allocation14], 4
          %s450 = int_to_ptr.vmem [resolvable:$true] %s449
          %455 = dma.hbm_to_vmem [thread:$0]  %s7, 6144, %s450, [#allocation15], 384, 384, 24
        $region32: #{upsample_forward.1} parent=11 // pred_fallthru
          _
        // Predicated region
        $region33: #{upsample_forward.1} parent=11 // pred_check
          %p456 = pneg %p242
        $region34: #{upsample_forward.1} parent=11 // pred_check_branch
          %458 = sbr.rel (%p456) target = $region36
        $region35: #{upsample_forward.1} parent=11 // pred_region
          %s460 = ssub.s32 6144, 6144
          %461 = vsyncadd [#allocation15], %s460
          %s462 = sshll.u32 [#allocation16], 4
          %s463 = int_to_ptr.vmem [resolvable:$true] %s462
          %468 = dma.hbm_to_vmem [thread:$0]  %s8, 6144, %s463, [#allocation15], 384, 384, 24
        $region36: #{upsample_forward.1} parent=11 // pred_fallthru
          _
        // Predicated region
        $region37: #{upsample_forward.1} parent=11 // pred_check
          %p469 = pneg %p263
        $region38: #{upsample_forward.1} parent=11 // pred_check_branch
          %471 = sbr.rel (%p469) target = $region40
        $region39: #{upsample_forward.1} parent=11 // pred_region
          %s473 = ssub.s32 16, 16
          %474 = vsyncadd [#allocation18], %s473
          %s476 = sshll.u32 [#allocation17], 4
          %s477 = int_to_ptr.vmem [resolvable:$true] %s476
          %479 = dma.hbm_to_vmem [thread:$0]  %s9, 16, %s477, [#allocation18]
        $region40: #{upsample_forward.1} parent=11 // pred_fallthru
          _
        // Predicated region
        $region41: #{upsample_forward.1} parent=11 // pred_check
          %p480 = pneg %p284
        $region42: #{upsample_forward.1} parent=11 // pred_check_branch
          %482 = sbr.rel (%p480) target = $region44
        $region43: #{upsample_forward.1} parent=11 // pred_region
          %s484 = ssub.s32 16, 16
          %485 = vsyncadd [#allocation18], %s484
          %s487 = sshll.u32 [#allocation19], 4
          %s488 = int_to_ptr.vmem [resolvable:$true] %s487
          %490 = dma.hbm_to_vmem [thread:$0]  %s10, 16, %s488, [#allocation18]
        $region44: #{upsample_forward.1} parent=11 // pred_fallthru
          _
        // Predicated region
        $region45: #{upsample_forward.1} parent=11 // pred_check
          %p491 = pneg %p305
        $region46: #{upsample_forward.1} parent=11 // pred_check_branch
          %493 = sbr.rel (%p491) target = $region48
        $region47: #{upsample_forward.1} parent=11 // pred_region
          %s495 = ssub.s32 16, 16
          %496 = vsyncadd [#allocation21], %s495
          %s498 = sshll.u32 [#allocation20], 4
          %s499 = int_to_ptr.vmem [resolvable:$true] %s498
          %501 = dma.hbm_to_vmem [thread:$0]  %s11, 16, %s499, [#allocation21]
        $region48: #{upsample_forward.1} parent=11 // pred_fallthru
          _
        // Predicated region
        $region49: #{upsample_forward.1} parent=11 // pred_check
          %p502 = pneg %p326
        $region50: #{upsample_forward.1} parent=11 // pred_check_branch
          %504 = sbr.rel (%p502) target = $region52
        $region51: #{upsample_forward.1} parent=11 // pred_region
          %s506 = ssub.s32 16, 16
          %507 = vsyncadd [#allocation21], %s506
          %s509 = sshll.u32 [#allocation22], 4
          %s510 = int_to_ptr.vmem [resolvable:$true] %s509
          %512 = dma.hbm_to_vmem [thread:$0]  %s12, 16, %s510, [#allocation21]
        $region52: #{upsample_forward.1} parent=11 // pred_fallthru
          _
      $region12: #{upsample_forward.1} parent=5 // pred_fallthru
        _
      %p513 = scmp.lt.s32.totalorder %s38, 2
      // Predicated region
      $region53: #{upsample_forward.1} parent=5 // pred_check
        %p514 = pneg %p513
      $region54: #{upsample_forward.1} parent=5 // pred_check_branch
        %516 = sbr.rel (%p514) target = $region56
      $region55: #{upsample_forward.1} parent=5 // pred_region
        // Predicated region
        $region57: #{upsample_forward.1} parent=55 // pred_check
          %p517 = pneg %p58
        $region58: #{upsample_forward.1} parent=55 // pred_check_branch
          %519 = sbr.rel (%p517) target = $region60
        $region59: #{upsample_forward.1} parent=55 // pred_region
          %s520 = sand.u32 %s48, 1
          %s521 = scalar_lea.sflag [#allocation3], %s520
          %s522 = sand.u32 %s48, 1
          %s523 = smul.addr %s522, 8
          %s524 = scalar_lea.vmem [#allocation2], %s523
          %s526 = ssub.s32 128, 128
          %527 = vsyncadd %s521, %s526
          %s528 = smul.addr %s38, 128
          %s529 = scalar_lea.hbm %s0, %s528
          %s531 = sshll.u32 %s524, 4
          %s532 = int_to_ptr.vmem [resolvable:$true] %s531
          %534 = dma.hbm_to_vmem [thread:$0]  %s529, 128, %s532, %s521
        $region60: #{upsample_forward.1} parent=55 // pred_fallthru
          _
        // Predicated region
        $region61: #{upsample_forward.1} parent=55 // pred_check
          %p535 = pneg %p84
        $region62: #{upsample_forward.1} parent=55 // pred_check_branch
          %537 = sbr.rel (%p535) target = $region64
        $region63: #{upsample_forward.1} parent=55 // pred_region
          %s538 = sand.u32 %s38, 1
          %s539 = scalar_lea.sflag [#allocation6], %s538
          %s540 = sand.u32 %s74, 1
          %s541 = smul.addr %s540, 8
          %s542 = scalar_lea.vmem [#allocation5], %s541
          %s544 = ssub.s32 128, 128
          %545 = vsyncadd %s539, %s544
          %s546 = smul.addr %s38, 128
          %s547 = scalar_lea.hbm %s1, %s546
          %s549 = sshll.u32 %s542, 4
          %s550 = int_to_ptr.vmem [resolvable:$true] %s549
          %552 = dma.hbm_to_vmem [thread:$0]  %s547, 128, %s550, %s539
        $region64: #{upsample_forward.1} parent=55 // pred_fallthru
          _
        // Predicated region
        $region65: #{upsample_forward.1} parent=55 // pred_check
          %p553 = pneg %p110
        $region66: #{upsample_forward.1} parent=55 // pred_check_branch
          %555 = sbr.rel (%p553) target = $region68
        $region67: #{upsample_forward.1} parent=55 // pred_region
          %s556 = sand.u32 %s38, 1
          %s557 = scalar_lea.sflag [#allocation6], %s556
          %s558 = sand.u32 %s100, 1
          %s559 = smul.addr %s558, 8
          %s560 = scalar_lea.vmem [#allocation7], %s559
          %s562 = ssub.s32 128, 128
          %563 = vsyncadd %s557, %s562
          %s564 = smul.addr %s38, 128
          %s565 = scalar_lea.hbm %s2, %s564
          %s567 = sshll.u32 %s560, 4
          %s568 = int_to_ptr.vmem [resolvable:$true] %s567
          %570 = dma.hbm_to_vmem [thread:$0]  %s565, 128, %s568, %s557
        $region68: #{upsample_forward.1} parent=55 // pred_fallthru
          _
      $region56: #{upsample_forward.1} parent=5 // pred_fallthru
        _
      %p571 = scmp.le.s32.totalorder 1, %s38
      %p572 = scmp.lt.s32.totalorder %s38, 3
      %p573 = pnand %p571, %p572
      %p574 = pneg %p573
      // Predicated region
      $region69: #{upsample_forward.1} parent=5 // pred_check
        _
      $region70: #{upsample_forward.1} parent=5 // pred_check_branch
        %576 = sbr.rel (%p573) target = $region72
      $region71: #{upsample_forward.1} parent=5 // pred_region
        %s577 = ssub.s32 %s38, 1
        %s578 = sand.u32 %s51, 1
        %s579 = scalar_lea.sflag [#allocation3], %s578
        %s580 = sand.u32 %s51, 1
        %s581 = smul.addr %s580, 8
        %s582 = scalar_lea.vmem [#allocation2], %s581
        // Predicated region
        $region73: #{upsample_forward.1} parent=71 // pred_check
          %p583 = pneg %p64
        $region74: #{upsample_forward.1} parent=71 // pred_check_branch
          %585 = sbr.rel (%p583) target = $region76
        $region75: #{upsample_forward.1} parent=71 // pred_region
          %586 = dma.done %s579, 128
        $region76: #{upsample_forward.1} parent=71 // pred_fallthru
          _
        %s587 = sand.u32 %s43, 1
        %s588 = scalar_lea.sflag [#allocation6], %s587
        %s589 = sand.u32 %s77, 1
        %s590 = smul.addr %s589, 8
        %s591 = scalar_lea.vmem [#allocation5], %s590
        // Predicated region
        $region77: #{upsample_forward.1} parent=71 // pred_check
          %p592 = pneg %p90
        $region78: #{upsample_forward.1} parent=71 // pred_check_branch
          %594 = sbr.rel (%p592) target = $region80
        $region79: #{upsample_forward.1} parent=71 // pred_region
          %595 = dma.done %s588, 128
        $region80: #{upsample_forward.1} parent=71 // pred_fallthru
          _
        %s596 = sand.u32 %s43, 1
        %s597 = scalar_lea.sflag [#allocation6], %s596
        %s598 = sand.u32 %s103, 1
        %s599 = smul.addr %s598, 8
        %s600 = scalar_lea.vmem [#allocation7], %s599
        // Predicated region
        $region81: #{upsample_forward.1} parent=71 // pred_check
          %p601 = pneg %p116
        $region82: #{upsample_forward.1} parent=71 // pred_check_branch
          %603 = sbr.rel (%p601) target = $region84
        $region83: #{upsample_forward.1} parent=71 // pred_region
          %604 = dma.done %s597, 128
        $region84: #{upsample_forward.1} parent=71 // pred_fallthru
          _
        // Predicated region
        $region85: #{upsample_forward.1} parent=71 // pred_check
          %p605 = pneg %p137
        $region86: #{upsample_forward.1} parent=71 // pred_check_branch
          %607 = sbr.rel (%p605) target = $region88
        $region87: #{upsample_forward.1} parent=71 // pred_region
          %608 = dma.done [#allocation9], 8192
        $region88: #{upsample_forward.1} parent=71 // pred_fallthru
          _
        // Predicated region
        $region89: #{upsample_forward.1} parent=71 // pred_check
          %p609 = pneg %p158
        $region90: #{upsample_forward.1} parent=71 // pred_check_branch
          %611 = sbr.rel (%p609) target = $region92
        $region91: #{upsample_forward.1} parent=71 // pred_region
          %612 = dma.done [#allocation9], 64
        $region92: #{upsample_forward.1} parent=71 // pred_fallthru
          _
        // Predicated region
        $region93: #{upsample_forward.1} parent=71 // pred_check
          %p613 = pneg %p179
        $region94: #{upsample_forward.1} parent=71 // pred_check_branch
          %615 = sbr.rel (%p613) target = $region96
        $region95: #{upsample_forward.1} parent=71 // pred_region
          %616 = dma.done [#allocation12], 6144
        $region96: #{upsample_forward.1} parent=71 // pred_fallthru
          _
        // Predicated region
        $region97: #{upsample_forward.1} parent=71 // pred_check
          %p617 = pneg %p200
        $region98: #{upsample_forward.1} parent=71 // pred_check_branch
          %619 = sbr.rel (%p617) target = $region100
        $region99: #{upsample_forward.1} parent=71 // pred_region
          %620 = dma.done [#allocation12], 6144
        $region100: #{upsample_forward.1} parent=71 // pred_fallthru
          _
        // Predicated region
        $region101: #{upsample_forward.1} parent=71 // pred_check
          %p621 = pneg %p221
        $region102: #{upsample_forward.1} parent=71 // pred_check_branch
          %623 = sbr.rel (%p621) target = $region104
        $region103: #{upsample_forward.1} parent=71 // pred_region
          %624 = dma.done [#allocation15], 6144
        $region104: #{upsample_forward.1} parent=71 // pred_fallthru
          _
        // Predicated region
        $region105: #{upsample_forward.1} parent=71 // pred_check
          %p625 = pneg %p242
        $region106: #{upsample_forward.1} parent=71 // pred_check_branch
          %627 = sbr.rel (%p625) target = $region108
        $region107: #{upsample_forward.1} parent=71 // pred_region
          %628 = dma.done [#allocation15], 6144
        $region108: #{upsample_forward.1} parent=71 // pred_fallthru
          _
        // Predicated region
        $region109: #{upsample_forward.1} parent=71 // pred_check
          %p629 = pneg %p263
        $region110: #{upsample_forward.1} parent=71 // pred_check_branch
          %631 = sbr.rel (%p629) target = $region112
        $region111: #{upsample_forward.1} parent=71 // pred_region
          %632 = dma.done [#allocation18], 16
        $region112: #{upsample_forward.1} parent=71 // pred_fallthru
          _
        // Predicated region
        $region113: #{upsample_forward.1} parent=71 // pred_check
          %p633 = pneg %p284
        $region114: #{upsample_forward.1} parent=71 // pred_check_branch
          %635 = sbr.rel (%p633) target = $region116
        $region115: #{upsample_forward.1} parent=71 // pred_region
          %636 = dma.done [#allocation18], 16
        $region116: #{upsample_forward.1} parent=71 // pred_fallthru
          _
        // Predicated region
        $region117: #{upsample_forward.1} parent=71 // pred_check
          %p637 = pneg %p305
        $region118: #{upsample_forward.1} parent=71 // pred_check_branch
          %639 = sbr.rel (%p637) target = $region120
        $region119: #{upsample_forward.1} parent=71 // pred_region
          %640 = dma.done [#allocation21], 16
        $region120: #{upsample_forward.1} parent=71 // pred_fallthru
          _
        // Predicated region
        $region121: #{upsample_forward.1} parent=71 // pred_check
          %p641 = pneg %p326
        $region122: #{upsample_forward.1} parent=71 // pred_check_branch
          %643 = sbr.rel (%p641) target = $region124
        $region123: #{upsample_forward.1} parent=71 // pred_region
          %644 = dma.done [#allocation21], 16
        $region124: #{upsample_forward.1} parent=71 // pred_fallthru
          _
        %s645 = sand.u32 %s51, 1
        %s646 = scalar_lea.sflag [#allocation3], %s645
        %s647 = sand.u32 %s51, 1
        %s648 = smul.addr %s647, 8
        %s649 = scalar_lea.vmem [#allocation2], %s648
        %p650 = pneg %p64
        %p651 = pneg %p61
        %s652 = sand.u32 %s43, 1
        %s653 = scalar_lea.sflag [#allocation6], %s652
        %s654 = sand.u32 %s77, 1
        %s655 = smul.addr %s654, 8
        %s656 = scalar_lea.vmem [#allocation5], %s655
        %p657 = pneg %p90
        %p658 = pneg %p87
        %s659 = sand.u32 %s43, 1
        %s660 = scalar_lea.sflag [#allocation6], %s659
        %s661 = sand.u32 %s103, 1
        %s662 = smul.addr %s661, 8
        %s663 = scalar_lea.vmem [#allocation7], %s662
        %p664 = pneg %p116
        %p665 = pneg %p113
        %p666 = pneg %p137
        %p667 = pneg %p134
        %p668 = pneg %p158
        %p669 = pneg %p155
        %p670 = pneg %p179
        %p671 = pneg %p176
        %p672 = pneg %p200
        %p673 = pneg %p197
        %p674 = pneg %p221
        %p675 = pneg %p218
        %p676 = pneg %p242
        %p677 = pneg %p239
        %p678 = pneg %p263
        %p679 = pneg %p260
        %p680 = pneg %p284
        %p681 = pneg %p281
        %p682 = pneg %p305
        %p683 = pneg %p302
        %p684 = pneg %p326
        %p685 = pneg %p323
        %p686 = pneg %p352
        %p687 = pneg %p349
        %s688 = sand.u32 %s339, 1
        %s689 = scalar_lea.sflag [#allocation4], %s688
        %s690 = sand.u32 %s339, 1
        %s691 = smul.addr %s690, 8
        %s692 = scalar_lea.vmem [#allocation23], %s691
        %p693 = pneg %p378
        %p694 = pneg %p375
        %s695 = sand.u32 %s365, 1
        %s696 = scalar_lea.sflag [#allocation25], %s695
        %s697 = sand.u32 %s365, 1
        %s698 = smul.addr %s697, 8
        %s699 = scalar_lea.vmem [#allocation24], %s698
        %v700 = vld [vmem:[%s582] sm:$0xff]
        %v701 = vld [vmem:[%s591] sm:$0xff]
        %v702 = vld [vmem:[%s600] sm:$0xff]
        %v703 = vld [vmem:[#allocation8] sm:$0xff]
        %v704 = vld [vmem:[#allocation8 + $0x8] sm:$0xff]
        %v705 = vld [vmem:[#allocation8 + $0x10] sm:$0xff]
        %v706 = vld [vmem:[#allocation8 + $0x18] sm:$0xff]
        %v707 = vld [vmem:[#allocation8 + $0x20] sm:$0xff]
        %v708 = vld [vmem:[#allocation8 + $0x28] sm:$0xff]
        %v709 = vld [vmem:[#allocation8 + $0x30] sm:$0xff]
        %v710 = vld [vmem:[#allocation8 + $0x38] sm:$0xff]
        %v711 = vld [vmem:[#allocation8 + $0x40] sm:$0xff]
        %v712 = vld [vmem:[#allocation8 + $0x48] sm:$0xff]
        %v713 = vld [vmem:[#allocation8 + $0x50] sm:$0xff]
        %v714 = vld [vmem:[#allocation8 + $0x58] sm:$0xff]
        %v715 = vld [vmem:[#allocation8 + $0x60] sm:$0xff]
        %v716 = vld [vmem:[#allocation8 + $0x68] sm:$0xff]
        %v717 = vld [vmem:[#allocation8 + $0x70] sm:$0xff]
        %v718 = vld [vmem:[#allocation8 + $0x78] sm:$0xff]
        %v719 = vld [vmem:[#allocation8 + $0x80] sm:$0xff]
        %v720 = vld [vmem:[#allocation8 + $0x88] sm:$0xff]
        %v721 = vld [vmem:[#allocation8 + $0x90] sm:$0xff]
        %v722 = vld [vmem:[#allocation8 + $0x98] sm:$0xff]
        %v723 = vld [vmem:[#allocation8 + $0xa0] sm:$0xff]
        %v724 = vld [vmem:[#allocation8 + $0xa8] sm:$0xff]
        %v725 = vld [vmem:[#allocation8 + $0xb0] sm:$0xff]
        %v726 = vld [vmem:[#allocation8 + $0xb8] sm:$0xff]
        %v727 = vld [vmem:[#allocation8 + $0xc0] sm:$0xff]
        %v728 = vld [vmem:[#allocation8 + $0xc8] sm:$0xff]
        %v729 = vld [vmem:[#allocation8 + $0xd0] sm:$0xff]
        %v730 = vld [vmem:[#allocation8 + $0xd8] sm:$0xff]
        %v731 = vld [vmem:[#allocation8 + $0xe0] sm:$0xff]
        %v732 = vld [vmem:[#allocation8 + $0xe8] sm:$0xff]
        %v733 = vld [vmem:[#allocation8 + $0xf0] sm:$0xff]
        %v734 = vld [vmem:[#allocation8 + $0xf8] sm:$0xff]
        %v735 = vld [vmem:[#allocation8 + $0x100] sm:$0xff]
        %v736 = vld [vmem:[#allocation8 + $0x108] sm:$0xff]
        %v737 = vld [vmem:[#allocation8 + $0x110] sm:$0xff]
        %v738 = vld [vmem:[#allocation8 + $0x118] sm:$0xff]
        %v739 = vld [vmem:[#allocation8 + $0x120] sm:$0xff]
        %v740 = vld [vmem:[#allocation8 + $0x128] sm:$0xff]
        %v741 = vld [vmem:[#allocation8 + $0x130] sm:$0xff]
        %v742 = vld [vmem:[#allocation8 + $0x138] sm:$0xff]
        %v743 = vld [vmem:[#allocation8 + $0x140] sm:$0xff]
        %v744 = vld [vmem:[#allocation8 + $0x148] sm:$0xff]
        %v745 = vld [vmem:[#allocation8 + $0x150] sm:$0xff]
        %v746 = vld [vmem:[#allocation8 + $0x158] sm:$0xff]
        %v747 = vld [vmem:[#allocation8 + $0x160] sm:$0xff]
        %v748 = vld [vmem:[#allocation8 + $0x168] sm:$0xff]
        %v749 = vld [vmem:[#allocation8 + $0x170] sm:$0xff]
        %v750 = vld [vmem:[#allocation8 + $0x178] sm:$0xff]
        %v751 = vld [vmem:[#allocation8 + $0x180] sm:$0xff]
        %v752 = vld [vmem:[#allocation8 + $0x188] sm:$0xff]
        %v753 = vld [vmem:[#allocation8 + $0x190] sm:$0xff]
        %v754 = vld [vmem:[#allocation8 + $0x198] sm:$0xff]
        %v755 = vld [vmem:[#allocation8 + $0x1a0] sm:$0xff]
        %v756 = vld [vmem:[#allocation8 + $0x1a8] sm:$0xff]
        %v757 = vld [vmem:[#allocation8 + $0x1b0] sm:$0xff]
        %v758 = vld [vmem:[#allocation8 + $0x1b8] sm:$0xff]
        %v759 = vld [vmem:[#allocation8 + $0x1c0] sm:$0xff]
        %v760 = vld [vmem:[#allocation8 + $0x1c8] sm:$0xff]
        %v761 = vld [vmem:[#allocation8 + $0x1d0] sm:$0xff]
        %v762 = vld [vmem:[#allocation8 + $0x1d8] sm:$0xff]
        %v763 = vld [vmem:[#allocation8 + $0x1e0] sm:$0xff]
        %v764 = vld [vmem:[#allocation8 + $0x1e8] sm:$0xff]
        %v765 = vld [vmem:[#allocation8 + $0x1f0] sm:$0xff]
        %v766 = vld [vmem:[#allocation8 + $0x1f8] sm:$0xff]
        %v767 = vld [vmem:[#allocation10] sm:$0xf]
        %v769 = vlaneseq
        %v770 = vshrl.u32 %v769, 7
        %v771 = vsub.s32 0, %v770
        %v772 = vrot.slane %v767, %v771
        %v773 = vlaneseq
        %v774 = vshrl.u32 %v773, 7
        %v775 = vsub.s32 1, %v774
        %v776 = vrot.slane %v767, %v775
        %v777 = vlaneseq
        %v778 = vshrl.u32 %v777, 7
        %v779 = vsub.s32 2, %v778
        %v780 = vrot.slane %v767, %v779
        %v781 = vlaneseq
        %v782 = vshrl.u32 %v781, 7
        %v783 = vsub.s32 3, %v782
        %v784 = vrot.slane %v767, %v783
        %789 = vmatprep.subr.mxu0 %v704
        %790 = vmatpush1.msra.mxu0 %v703
        %791 = vmatprep.subr.mxu0 %v708
        %792 = vmatpush1.msra.mxu0 %v707
        %793 = vmatprep.subr.mxu0 %v712
        %794 = vmatpush1.msra.mxu0 %v711
        %795 = vmatprep.subr.mxu0 %v716
        %796 = vmatpush1.msra.mxu0 %v715
        %797 = vmatprep.subr.mxu0 %v720
        %798 = vmatpush1.msra.mxu0 %v719
        %799 = vmatprep.subr.mxu0 %v724
        %800 = vmatpush1.msra.mxu0 %v723
        %801 = vmatprep.subr.mxu0 %v728
        %802 = vmatpush1.msra.mxu0 %v727
        %803 = vmatprep.subr.mxu0 %v732
        %804 = vmatpush1.msra.mxu0 %v731
        %805 = vmatprep.subr.mxu0 %v736
        %806 = vmatpush1.msra.mxu0 %v735
        %807 = vmatprep.subr.mxu0 %v740
        %808 = vmatpush1.msra.mxu0 %v739
        %809 = vmatprep.subr.mxu0 %v744
        %810 = vmatpush1.msra.mxu0 %v743
        %811 = vmatprep.subr.mxu0 %v748
        %812 = vmatpush1.msra.mxu0 %v747
        %813 = vmatprep.subr.mxu0 %v752
        %814 = vmatpush1.msra.mxu0 %v751
        %815 = vmatprep.subr.mxu0 %v756
        %816 = vmatpush1.msra.mxu0 %v755
        %817 = vmatprep.subr.mxu0 %v760
        %818 = vmatpush1.msra.mxu0 %v759
        %819 = vmatprep.subr.mxu0 %v764
        %820 = vmatpush1.msra.mxu0 %v763
        %821 = vmatprep.subr.mxu0 0.0
        %822 = vmatpush1.msra.mxu0 0.0
        %823 = vmatprep.subr.mxu0 0.0
        %824 = vmatpush1.msra.mxu0 0.0
        %825 = vmatprep.subr.mxu0 0.0
        %826 = vmatpush1.msra.mxu0 0.0
        %827 = vmatprep.subr.mxu0 0.0
        %828 = vmatpush1.msra.mxu0 0.0
        %829 = vmatprep.subr.mxu0 0.0
        %830 = vmatpush1.msra.mxu0 0.0
        %831 = vmatprep.subr.mxu0 0.0
        %832 = vmatpush1.msra.mxu0 0.0
        %833 = vmatprep.subr.mxu0 0.0
        %834 = vmatpush1.msra.mxu0 0.0
        %835 = vmatprep.subr.mxu0 0.0
        %836 = vmatpush1.msra.mxu0 0.0
        %837 = vmatprep.subr.mxu0 0.0
        %838 = vmatpush1.msra.mxu0 0.0
        %839 = vmatprep.subr.mxu0 0.0
        %840 = vmatpush1.msra.mxu0 0.0
        %841 = vmatprep.subr.mxu0 0.0
        %842 = vmatpush1.msra.mxu0 0.0
        %843 = vmatprep.subr.mxu0 0.0
        %844 = vmatpush1.msra.mxu0 0.0
        %845 = vmatprep.subr.mxu0 0.0
        %846 = vmatpush1.msra.mxu0 0.0
        %847 = vmatprep.subr.mxu0 0.0
        %848 = vmatpush1.msra.mxu0 0.0
        %849 = vmatprep.subr.mxu0 0.0
        %850 = vmatpush1.msra.mxu0 0.0
        %851 = vmatprep.subr.mxu0 0.0
        %852 = vmatpush1.msra.mxu0 0.0
        %853 = vmatprep.mubr.f32.mxu0 0.0
        %854 = vmatmul.mubr.f32.gmra.mrb[0].mxu0 %v700
        %v855 = vpop.f32.mrb[0].mxu0
        %v856 = vadd.f32 %v772, %v855
        %v857 = vpop.f32.mrb[0].mxu0
        %v858 = vadd.f32 %v776, %v857
        %859 = vdwg.mxu0
        %860 = vmatprep.subr.mxu0 %v706
        %861 = vmatpush1.msra.mxu0 %v705
        %862 = vmatprep.subr.mxu0 %v710
        %863 = vmatpush1.msra.mxu0 %v709
        %864 = vmatprep.subr.mxu0 %v714
        %865 = vmatpush1.msra.mxu0 %v713
        %866 = vmatprep.subr.mxu0 %v718
        %867 = vmatpush1.msra.mxu0 %v717
        %868 = vmatprep.subr.mxu0 %v722
        %869 = vmatpush1.msra.mxu0 %v721
        %870 = vmatprep.subr.mxu0 %v726
        %871 = vmatpush1.msra.mxu0 %v725
        %872 = vmatprep.subr.mxu0 %v730
        %873 = vmatpush1.msra.mxu0 %v729
        %874 = vmatprep.subr.mxu0 %v734
        %875 = vmatpush1.msra.mxu0 %v733
        %876 = vmatprep.subr.mxu0 %v738
        %877 = vmatpush1.msra.mxu0 %v737
        %878 = vmatprep.subr.mxu0 %v742
        %879 = vmatpush1.msra.mxu0 %v741
        %880 = vmatprep.subr.mxu0 %v746
        %881 = vmatpush1.msra.mxu0 %v745
        %882 = vmatprep.subr.mxu0 %v750
        %883 = vmatpush1.msra.mxu0 %v749
        %884 = vmatprep.subr.mxu0 %v754
        %885 = vmatpush1.msra.mxu0 %v753
        %886 = vmatprep.subr.mxu0 %v758
        %887 = vmatpush1.msra.mxu0 %v757
        %888 = vmatprep.subr.mxu0 %v762
        %889 = vmatpush1.msra.mxu0 %v761
        %890 = vmatprep.subr.mxu0 %v766
        %891 = vmatpush1.msra.mxu0 %v765
        %892 = vmatprep.subr.mxu0 0.0
        %893 = vmatpush1.msra.mxu0 0.0
        %894 = vmatprep.subr.mxu0 0.0
        %895 = vmatpush1.msra.mxu0 0.0
        %896 = vmatprep.subr.mxu0 0.0
        %897 = vmatpush1.msra.mxu0 0.0
        %898 = vmatprep.subr.mxu0 0.0
        %899 = vmatpush1.msra.mxu0 0.0
        %900 = vmatprep.subr.mxu0 0.0
        %901 = vmatpush1.msra.mxu0 0.0
        %902 = vmatprep.subr.mxu0 0.0
        %903 = vmatpush1.msra.mxu0 0.0
        %904 = vmatprep.subr.mxu0 0.0
        %905 = vmatpush1.msra.mxu0 0.0
        %906 = vmatprep.subr.mxu0 0.0
        %907 = vmatpush1.msra.mxu0 0.0
        %908 = vmatprep.subr.mxu0 0.0
        %909 = vmatpush1.msra.mxu0 0.0
        %910 = vmatprep.subr.mxu0 0.0
        %911 = vmatpush1.msra.mxu0 0.0
        %912 = vmatprep.subr.mxu0 0.0
        %913 = vmatpush1.msra.mxu0 0.0
        %914 = vmatprep.subr.mxu0 0.0
        %915 = vmatpush1.msra.mxu0 0.0
        %916 = vmatprep.subr.mxu0 0.0
        %917 = vmatpush1.msra.mxu0 0.0
        %918 = vmatprep.subr.mxu0 0.0
        %919 = vmatpush1.msra.mxu0 0.0
        %920 = vmatprep.subr.mxu0 0.0
        %921 = vmatpush1.msra.mxu0 0.0
        %922 = vmatprep.subr.mxu0 0.0
        %923 = vmatpush1.msra.mxu0 0.0
        %924 = vmatprep.mubr.f32.mxu0 0.0
        %925 = vmatmul.mubr.f32.gmra.mrb[0].mxu0 %v700
        %v926 = vpop.f32.mrb[0].mxu0
        %v927 = vadd.f32 %v780, %v926
        %v928 = vpop.f32.mrb[0].mxu0
        %v929 = vadd.f32 %v784, %v928
        %930 = vdwg.mxu0
        %v931 = vld [vmem:[#allocation11] sm:$0xff]
        %v932 = vld [vmem:[#allocation11 + $0x8] sm:$0xff]
        %v933 = vld [vmem:[#allocation11 + $0x10] sm:$0xff]
        %v934 = vld [vmem:[#allocation11 + $0x18] sm:$0xff]
        %v935 = vld [vmem:[#allocation11 + $0x20] sm:$0xff]
        %v936 = vld [vmem:[#allocation11 + $0x28] sm:$0xff]
        %v937 = vld [vmem:[#allocation11 + $0x30] sm:$0xff]
        %v938 = vld [vmem:[#allocation11 + $0x38] sm:$0xff]
        %v939 = vld [vmem:[#allocation11 + $0x40] sm:$0xff]
        %v940 = vld [vmem:[#allocation11 + $0x48] sm:$0xff]
        %v941 = vld [vmem:[#allocation11 + $0x50] sm:$0xff]
        %v942 = vld [vmem:[#allocation11 + $0x58] sm:$0xff]
        %v943 = vld [vmem:[#allocation11 + $0x60] sm:$0xff]
        %v944 = vld [vmem:[#allocation11 + $0x68] sm:$0xff]
        %v945 = vld [vmem:[#allocation11 + $0x70] sm:$0xff]
        %v946 = vld [vmem:[#allocation11 + $0x78] sm:$0xff]
        %v947 = vld [vmem:[#allocation11 + $0x80] sm:$0xff]
        %v948 = vld [vmem:[#allocation11 + $0x88] sm:$0xff]
        %v949 = vld [vmem:[#allocation11 + $0x90] sm:$0xff]
        %v950 = vld [vmem:[#allocation11 + $0x98] sm:$0xff]
        %v951 = vld [vmem:[#allocation11 + $0xa0] sm:$0xff]
        %v952 = vld [vmem:[#allocation11 + $0xa8] sm:$0xff]
        %v953 = vld [vmem:[#allocation11 + $0xb0] sm:$0xff]
        %v954 = vld [vmem:[#allocation11 + $0xb8] sm:$0xff]
        %v955 = vld [vmem:[#allocation11 + $0xc0] sm:$0xff]
        %v956 = vld [vmem:[#allocation11 + $0xc8] sm:$0xff]
        %v957 = vld [vmem:[#allocation11 + $0xd0] sm:$0xff]
        %v958 = vld [vmem:[#allocation11 + $0xd8] sm:$0xff]
        %v959 = vld [vmem:[#allocation11 + $0xe0] sm:$0xff]
        %v960 = vld [vmem:[#allocation11 + $0xe8] sm:$0xff]
        %v961 = vld [vmem:[#allocation11 + $0xf0] sm:$0xff]
        %v962 = vld [vmem:[#allocation11 + $0xf8] sm:$0xff]
        %v963 = vld [vmem:[#allocation11 + $0x100] sm:$0xff]
        %v964 = vld [vmem:[#allocation11 + $0x108] sm:$0xff]
        %v965 = vld [vmem:[#allocation11 + $0x110] sm:$0xff]
        %v966 = vld [vmem:[#allocation11 + $0x118] sm:$0xff]
        %v967 = vld [vmem:[#allocation11 + $0x120] sm:$0xff]
        %v968 = vld [vmem:[#allocation11 + $0x128] sm:$0xff]
        %v969 = vld [vmem:[#allocation11 + $0x130] sm:$0xff]
        %v970 = vld [vmem:[#allocation11 + $0x138] sm:$0xff]
        %v971 = vld [vmem:[#allocation11 + $0x140] sm:$0xff]
        %v972 = vld [vmem:[#allocation11 + $0x148] sm:$0xff]
        %v973 = vld [vmem:[#allocation11 + $0x150] sm:$0xff]
        %v974 = vld [vmem:[#allocation11 + $0x158] sm:$0xff]
        %v975 = vld [vmem:[#allocation11 + $0x160] sm:$0xff]
        %v976 = vld [vmem:[#allocation11 + $0x168] sm:$0xff]
        %v977 = vld [vmem:[#allocation11 + $0x170] sm:$0xff]
        %v978 = vld [vmem:[#allocation11 + $0x178] sm:$0xff]
        %979 = vmatprep.subr.mxu0 %v932
        %980 = vmatpush1.msra.mxu0 %v931
        %981 = vmatprep.subr.mxu0 %v935
        %982 = vmatpush1.msra.mxu0 %v934
        %983 = vmatprep.subr.mxu0 %v938
        %984 = vmatpush1.msra.mxu0 %v937
        %985 = vmatprep.subr.mxu0 %v941
        %986 = vmatpush1.msra.mxu0 %v940
        %987 = vmatprep.subr.mxu0 %v944
        %988 = vmatpush1.msra.mxu0 %v943
        %989 = vmatprep.subr.mxu0 %v947
        %990 = vmatpush1.msra.mxu0 %v946
        %991 = vmatprep.subr.mxu0 %v950
        %992 = vmatpush1.msra.mxu0 %v949
        %993 = vmatprep.subr.mxu0 %v953
        %994 = vmatpush1.msra.mxu0 %v952
        %995 = vmatprep.subr.mxu0 %v956
        %996 = vmatpush1.msra.mxu0 %v955
        %997 = vmatprep.subr.mxu0 %v959
        %998 = vmatpush1.msra.mxu0 %v958
        %999 = vmatprep.subr.mxu0 %v962
        %1000 = vmatpush1.msra.mxu0 %v961
        %1001 = vmatprep.subr.mxu0 %v965
        %1002 = vmatpush1.msra.mxu0 %v964
        %1003 = vmatprep.subr.mxu0 %v968
        %1004 = vmatpush1.msra.mxu0 %v967
        %1005 = vmatprep.subr.mxu0 %v971
        %1006 = vmatpush1.msra.mxu0 %v970
        %1007 = vmatprep.subr.mxu0 %v974
        %1008 = vmatpush1.msra.mxu0 %v973
        %1009 = vmatprep.subr.mxu0 %v977
        %1010 = vmatpush1.msra.mxu0 %v976
        %1011 = vmatprep.subr.mxu0 0.0
        %1012 = vmatpush1.msra.mxu0 0.0
        %1013 = vmatprep.subr.mxu0 0.0
        %1014 = vmatpush1.msra.mxu0 0.0
        %1015 = vmatprep.subr.mxu0 0.0
        %1016 = vmatpush1.msra.mxu0 0.0
        %1017 = vmatprep.subr.mxu0 0.0
        %1018 = vmatpush1.msra.mxu0 0.0
        %1019 = vmatprep.subr.mxu0 0.0
        %1020 = vmatpush1.msra.mxu0 0.0
        %1021 = vmatprep.subr.mxu0 0.0
        %1022 = vmatpush1.msra.mxu0 0.0
        %1023 = vmatprep.subr.mxu0 0.0
        %1024 = vmatpush1.msra.mxu0 0.0
        %1025 = vmatprep.subr.mxu0 0.0
        %1026 = vmatpush1.msra.mxu0 0.0
        %1027 = vmatprep.subr.mxu0 0.0
        %1028 = vmatpush1.msra.mxu0 0.0
        %1029 = vmatprep.subr.mxu0 0.0
        %1030 = vmatpush1.msra.mxu0 0.0
        %1031 = vmatprep.subr.mxu0 0.0
        %1032 = vmatpush1.msra.mxu0 0.0
        %1033 = vmatprep.subr.mxu0 0.0
        %1034 = vmatpush1.msra.mxu0 0.0
        %1035 = vmatprep.subr.mxu0 0.0
        %1036 = vmatpush1.msra.mxu0 0.0
        %1037 = vmatprep.subr.mxu0 0.0
        %1038 = vmatpush1.msra.mxu0 0.0
        %1039 = vmatprep.subr.mxu0 0.0
        %1040 = vmatpush1.msra.mxu0 0.0
        %1041 = vmatprep.subr.mxu0 0.0
        %1042 = vmatpush1.msra.mxu0 0.0
        %1043 = vmatprep.mubr.f32.mxu0 0.0
        %1044 = vmatmul.mubr.f32.gmra.mrb[0].mxu0 %v701
        %v1045 = vpop.f32.mrb[0].mxu0
        %v1046 = vadd.f32 0.0, %v1045
        %v1047 = vpop.f32.mrb[0].mxu0
        %v1048 = vadd.f32 0.0, %v1047
        %1049 = vdwg.mxu0
        %1050 = vmatprep.subr.mxu0 0.0
        %1051 = vmatpush1.msra.mxu0 %v933
        %1052 = vmatprep.subr.mxu0 0.0
        %1053 = vmatpush1.msra.mxu0 %v936
        %1054 = vmatprep.subr.mxu0 0.0
        %1055 = vmatpush1.msra.mxu0 %v939
        %1056 = vmatprep.subr.mxu0 0.0
        %1057 = vmatpush1.msra.mxu0 %v942
        %1058 = vmatprep.subr.mxu0 0.0
        %1059 = vmatpush1.msra.mxu0 %v945
        %1060 = vmatprep.subr.mxu0 0.0
        %1061 = vmatpush1.msra.mxu0 %v948
        %1062 = vmatprep.subr.mxu0 0.0
        %1063 = vmatpush1.msra.mxu0 %v951
        %1064 = vmatprep.subr.mxu0 0.0
        %1065 = vmatpush1.msra.mxu0 %v954
        %1066 = vmatprep.subr.mxu0 0.0
        %1067 = vmatpush1.msra.mxu0 %v957
        %1068 = vmatprep.subr.mxu0 0.0
        %1069 = vmatpush1.msra.mxu0 %v960
        %1070 = vmatprep.subr.mxu0 0.0
        %1071 = vmatpush1.msra.mxu0 %v963
        %1072 = vmatprep.subr.mxu0 0.0
        %1073 = vmatpush1.msra.mxu0 %v966
        %1074 = vmatprep.subr.mxu0 0.0
        %1075 = vmatpush1.msra.mxu0 %v969
        %1076 = vmatprep.subr.mxu0 0.0
        %1077 = vmatpush1.msra.mxu0 %v972
        %1078 = vmatprep.subr.mxu0 0.0
        %1079 = vmatpush1.msra.mxu0 %v975
        %1080 = vmatprep.subr.mxu0 0.0
        %1081 = vmatpush1.msra.mxu0 %v978
        %1082 = vmatprep.subr.mxu0 0.0
        %1083 = vmatpush1.msra.mxu0 0.0
        %1084 = vmatprep.subr.mxu0 0.0
        %1085 = vmatpush1.msra.mxu0 0.0
        %1086 = vmatprep.subr.mxu0 0.0
        %1087 = vmatpush1.msra.mxu0 0.0
        %1088 = vmatprep.subr.mxu0 0.0
        %1089 = vmatpush1.msra.mxu0 0.0
        %1090 = vmatprep.subr.mxu0 0.0
        %1091 = vmatpush1.msra.mxu0 0.0
        %1092 = vmatprep.subr.mxu0 0.0
        %1093 = vmatpush1.msra.mxu0 0.0
        %1094 = vmatprep.subr.mxu0 0.0
        %1095 = vmatpush1.msra.mxu0 0.0
        %1096 = vmatprep.subr.mxu0 0.0
        %1097 = vmatpush1.msra.mxu0 0.0
        %1098 = vmatprep.subr.mxu0 0.0
        %1099 = vmatpush1.msra.mxu0 0.0
        %1100 = vmatprep.subr.mxu0 0.0
        %1101 = vmatpush1.msra.mxu0 0.0
        %1102 = vmatprep.subr.mxu0 0.0
        %1103 = vmatpush1.msra.mxu0 0.0
        %1104 = vmatprep.subr.mxu0 0.0
        %1105 = vmatpush1.msra.mxu0 0.0
        %1106 = vmatprep.subr.mxu0 0.0
        %1107 = vmatpush1.msra.mxu0 0.0
        %1108 = vmatprep.subr.mxu0 0.0
        %1109 = vmatpush1.msra.mxu0 0.0
        %1110 = vmatprep.subr.mxu0 0.0
        %1111 = vmatpush1.msra.mxu0 0.0
        %1112 = vmatprep.subr.mxu0 0.0
        %1113 = vmatpush1.msra.mxu0 0.0
        %1114 = vmatprep.mubr.f32.mxu0 0.0
        %1115 = vmatmul.mubr.f32.gmra.mrb[0].mxu0 %v701
        %v1116 = vpop.f32.mrb[0].mxu0
        %v1117 = vadd.f32 0.0, %v1116
        %v1118 = vpop.f32.mrb[0].mxu0
        %1119 = vdwg.mxu0
        %v1120 = vld [vmem:[#allocation13] sm:$0xff]
        %v1121 = vld [vmem:[#allocation13 + $0x8] sm:$0xff]
        %v1122 = vld [vmem:[#allocation13 + $0x10] sm:$0xff]
        %v1123 = vld [vmem:[#allocation13 + $0x18] sm:$0xff]
        %v1124 = vld [vmem:[#allocation13 + $0x20] sm:$0xff]
        %v1125 = vld [vmem:[#allocation13 + $0x28] sm:$0xff]
        %v1126 = vld [vmem:[#allocation13 + $0x30] sm:$0xff]
        %v1127 = vld [vmem:[#allocation13 + $0x38] sm:$0xff]
        %v1128 = vld [vmem:[#allocation13 + $0x40] sm:$0xff]
        %v1129 = vld [vmem:[#allocation13 + $0x48] sm:$0xff]
        %v1130 = vld [vmem:[#allocation13 + $0x50] sm:$0xff]
        %v1131 = vld [vmem:[#allocation13 + $0x58] sm:$0xff]
        %v1132 = vld [vmem:[#allocation13 + $0x60] sm:$0xff]
        %v1133 = vld [vmem:[#allocation13 + $0x68] sm:$0xff]
        %v1134 = vld [vmem:[#allocation13 + $0x70] sm:$0xff]
        %v1135 = vld [vmem:[#allocation13 + $0x78] sm:$0xff]
        %v1136 = vld [vmem:[#allocation13 + $0x80] sm:$0xff]
        %v1137 = vld [vmem:[#allocation13 + $0x88] sm:$0xff]
        %v1138 = vld [vmem:[#allocation13 + $0x90] sm:$0xff]
        %v1139 = vld [vmem:[#allocation13 + $0x98] sm:$0xff]
        %v1140 = vld [vmem:[#allocation13 + $0xa0] sm:$0xff]
        %v1141 = vld [vmem:[#allocation13 + $0xa8] sm:$0xff]
        %v1142 = vld [vmem:[#allocation13 + $0xb0] sm:$0xff]
        %v1143 = vld [vmem:[#allocation13 + $0xb8] sm:$0xff]
        %v1144 = vld [vmem:[#allocation13 + $0xc0] sm:$0xff]
        %v1145 = vld [vmem:[#allocation13 + $0xc8] sm:$0xff]
        %v1146 = vld [vmem:[#allocation13 + $0xd0] sm:$0xff]
        %v1147 = vld [vmem:[#allocation13 + $0xd8] sm:$0xff]
        %v1148 = vld [vmem:[#allocation13 + $0xe0] sm:$0xff]
        %v1149 = vld [vmem:[#allocation13 + $0xe8] sm:$0xff]
        %v1150 = vld [vmem:[#allocation13 + $0xf0] sm:$0xff]
        %v1151 = vld [vmem:[#allocation13 + $0xf8] sm:$0xff]
        %v1152 = vld [vmem:[#allocation13 + $0x100] sm:$0xff]
        %v1153 = vld [vmem:[#allocation13 + $0x108] sm:$0xff]
        %v1154 = vld [vmem:[#allocation13 + $0x110] sm:$0xff]
        %v1155 = vld [vmem:[#allocation13 + $0x118] sm:$0xff]
        %v1156 = vld [vmem:[#allocation13 + $0x120] sm:$0xff]
        %v1157 = vld [vmem:[#allocation13 + $0x128] sm:$0xff]
        %v1158 = vld [vmem:[#allocation13 + $0x130] sm:$0xff]
        %v1159 = vld [vmem:[#allocation13 + $0x138] sm:$0xff]
        %v1160 = vld [vmem:[#allocation13 + $0x140] sm:$0xff]
        %v1161 = vld [vmem:[#allocation13 + $0x148] sm:$0xff]
        %v1162 = vld [vmem:[#allocation13 + $0x150] sm:$0xff]
        %v1163 = vld [vmem:[#allocation13 + $0x158] sm:$0xff]
        %v1164 = vld [vmem:[#allocation13 + $0x160] sm:$0xff]
        %v1165 = vld [vmem:[#allocation13 + $0x168] sm:$0xff]
        %v1166 = vld [vmem:[#allocation13 + $0x170] sm:$0xff]
        %v1167 = vld [vmem:[#allocation13 + $0x178] sm:$0xff]
        %1168 = vmatprep.subr.mxu0 %v1121
        %1169 = vmatpush1.msra.mxu0 %v1120
        %1170 = vmatprep.subr.mxu0 %v1124
        %1171 = vmatpush1.msra.mxu0 %v1123
        %1172 = vmatprep.subr.mxu0 %v1127
        %1173 = vmatpush1.msra.mxu0 %v1126
        %1174 = vmatprep.subr.mxu0 %v1130
        %1175 = vmatpush1.msra.mxu0 %v1129
        %1176 = vmatprep.subr.mxu0 %v1133
        %1177 = vmatpush1.msra.mxu0 %v1132
        %1178 = vmatprep.subr.mxu0 %v1136
        %1179 = vmatpush1.msra.mxu0 %v1135
        %1180 = vmatprep.subr.mxu0 %v1139
        %1181 = vmatpush1.msra.mxu0 %v1138
        %1182 = vmatprep.subr.mxu0 %v1142
        %1183 = vmatpush1.msra.mxu0 %v1141
        %1184 = vmatprep.subr.mxu0 %v1145
        %1185 = vmatpush1.msra.mxu0 %v1144
        %1186 = vmatprep.subr.mxu0 %v1148
        %1187 = vmatpush1.msra.mxu0 %v1147
        %1188 = vmatprep.subr.mxu0 %v1151
        %1189 = vmatpush1.msra.mxu0 %v1150
        %1190 = vmatprep.subr.mxu0 %v1154
        %1191 = vmatpush1.msra.mxu0 %v1153
        %1192 = vmatprep.subr.mxu0 %v1157
        %1193 = vmatpush1.msra.mxu0 %v1156
        %1194 = vmatprep.subr.mxu0 %v1160
        %1195 = vmatpush1.msra.mxu0 %v1159
        %1196 = vmatprep.subr.mxu0 %v1163
        %1197 = vmatpush1.msra.mxu0 %v1162
        %1198 = vmatprep.subr.mxu0 %v1166
        %1199 = vmatpush1.msra.mxu0 %v1165
        %1200 = vmatprep.subr.mxu0 0.0
        %1201 = vmatpush1.msra.mxu0 0.0
        %1202 = vmatprep.subr.mxu0 0.0
        %1203 = vmatpush1.msra.mxu0 0.0
        %1204 = vmatprep.subr.mxu0 0.0
        %1205 = vmatpush1.msra.mxu0 0.0
        %1206 = vmatprep.subr.mxu0 0.0
        %1207 = vmatpush1.msra.mxu0 0.0
        %1208 = vmatprep.subr.mxu0 0.0
        %1209 = vmatpush1.msra.mxu0 0.0
        %1210 = vmatprep.subr.mxu0 0.0
        %1211 = vmatpush1.msra.mxu0 0.0
        %1212 = vmatprep.subr.mxu0 0.0
        %1213 = vmatpush1.msra.mxu0 0.0
        %1214 = vmatprep.subr.mxu0 0.0
        %1215 = vmatpush1.msra.mxu0 0.0
        %1216 = vmatprep.subr.mxu0 0.0
        %1217 = vmatpush1.msra.mxu0 0.0
        %1218 = vmatprep.subr.mxu0 0.0
        %1219 = vmatpush1.msra.mxu0 0.0
        %1220 = vmatprep.subr.mxu0 0.0
        %1221 = vmatpush1.msra.mxu0 0.0
        %1222 = vmatprep.subr.mxu0 0.0
        %1223 = vmatpush1.msra.mxu0 0.0
        %1224 = vmatprep.subr.mxu0 0.0
        %1225 = vmatpush1.msra.mxu0 0.0
        %1226 = vmatprep.subr.mxu0 0.0
        %1227 = vmatpush1.msra.mxu0 0.0
        %1228 = vmatprep.subr.mxu0 0.0
        %1229 = vmatpush1.msra.mxu0 0.0
        %1230 = vmatprep.subr.mxu0 0.0
        %1231 = vmatpush1.msra.mxu0 0.0
        %1232 = vmatprep.mubr.f32.mxu0 0.0
        %1233 = vmatmul.mubr.f32.gmra.mrb[0].mxu0 %v702
        %v1234 = vpop.f32.mrb[0].mxu0
        %v1235 = vadd.f32 0.0, %v1234
        %v1236 = vpop.f32.mrb[0].mxu0
        %v1237 = vadd.f32 0.0, %v1236
        %1238 = vdwg.mxu0
        %1239 = vmatprep.subr.mxu0 0.0
        %1240 = vmatpush1.msra.mxu0 %v1122
        %1241 = vmatprep.subr.mxu0 0.0
        %1242 = vmatpush1.msra.mxu0 %v1125
        %1243 = vmatprep.subr.mxu0 0.0
        %1244 = vmatpush1.msra.mxu0 %v1128
        %1245 = vmatprep.subr.mxu0 0.0
        %1246 = vmatpush1.msra.mxu0 %v1131
        %1247 = vmatprep.subr.mxu0 0.0
        %1248 = vmatpush1.msra.mxu0 %v1134
        %1249 = vmatprep.subr.mxu0 0.0
        %1250 = vmatpush1.msra.mxu0 %v1137
        %1251 = vmatprep.subr.mxu0 0.0
        %1252 = vmatpush1.msra.mxu0 %v1140
        %1253 = vmatprep.subr.mxu0 0.0
        %1254 = vmatpush1.msra.mxu0 %v1143
        %1255 = vmatprep.subr.mxu0 0.0
        %1256 = vmatpush1.msra.mxu0 %v1146
        %1257 = vmatprep.subr.mxu0 0.0
        %1258 = vmatpush1.msra.mxu0 %v1149
        %1259 = vmatprep.subr.mxu0 0.0
        %1260 = vmatpush1.msra.mxu0 %v1152
        %1261 = vmatprep.subr.mxu0 0.0
        %1262 = vmatpush1.msra.mxu0 %v1155
        %1263 = vmatprep.subr.mxu0 0.0
        %1264 = vmatpush1.msra.mxu0 %v1158
        %1265 = vmatprep.subr.mxu0 0.0
        %1266 = vmatpush1.msra.mxu0 %v1161
        %1267 = vmatprep.subr.mxu0 0.0
        %1268 = vmatpush1.msra.mxu0 %v1164
        %1269 = vmatprep.subr.mxu0 0.0
        %1270 = vmatpush1.msra.mxu0 %v1167
        %1271 = vmatprep.subr.mxu0 0.0
        %1272 = vmatpush1.msra.mxu0 0.0
        %1273 = vmatprep.subr.mxu0 0.0
        %1274 = vmatpush1.msra.mxu0 0.0
        %1275 = vmatprep.subr.mxu0 0.0
        %1276 = vmatpush1.msra.mxu0 0.0
        %1277 = vmatprep.subr.mxu0 0.0
        %1278 = vmatpush1.msra.mxu0 0.0
        %1279 = vmatprep.subr.mxu0 0.0
        %1280 = vmatpush1.msra.mxu0 0.0
        %1281 = vmatprep.subr.mxu0 0.0
        %1282 = vmatpush1.msra.mxu0 0.0
        %1283 = vmatprep.subr.mxu0 0.0
        %1284 = vmatpush1.msra.mxu0 0.0
        %1285 = vmatprep.subr.mxu0 0.0
        %1286 = vmatpush1.msra.mxu0 0.0
        %1287 = vmatprep.subr.mxu0 0.0
        %1288 = vmatpush1.msra.mxu0 0.0
        %1289 = vmatprep.subr.mxu0 0.0
        %1290 = vmatpush1.msra.mxu0 0.0
        %1291 = vmatprep.subr.mxu0 0.0
        %1292 = vmatpush1.msra.mxu0 0.0
        %1293 = vmatprep.subr.mxu0 0.0
        %1294 = vmatpush1.msra.mxu0 0.0
        %1295 = vmatprep.subr.mxu0 0.0
        %1296 = vmatpush1.msra.mxu0 0.0
        %1297 = vmatprep.subr.mxu0 0.0
        %1298 = vmatpush1.msra.mxu0 0.0
        %1299 = vmatprep.subr.mxu0 0.0
        %1300 = vmatpush1.msra.mxu0 0.0
        %1301 = vmatprep.subr.mxu0 0.0
        %1302 = vmatpush1.msra.mxu0 0.0
        %1303 = vmatprep.mubr.f32.mxu0 0.0
        %1304 = vmatmul.mubr.f32.gmra.mrb[0].mxu0 %v702
        %v1305 = vpop.f32.mrb[0].mxu0
        %v1306 = vadd.f32 0.0, %v1305
        %v1307 = vpop.f32.mrb[0].mxu0
        %1308 = vdwg.mxu0
        %v1309 = vadd.f32 %v856, %v1046
        %v1310 = vadd.f32 %v1309, %v1235
        %v1311 = vadd.f32 %v858, %v1237
        %v1312 = vrot.slane %v1311, 7
        %v1313 = vlaneseq
        %v1314 = vshrl.u32 %v1313, 7
        %vm1315 = vcmp.eq.s32.totalorder %v1314, 0
        %v1316 = vsel %vm1315, 0.0, %v1312
        %v1317 = vadd.f32 %v1310, %v1316
        %v1318 = vadd.f32 %v927, %v1048
        %v1319 = vadd.f32 %v1318, %v1306
        %v1320 = vadd.f32 %v929, %v1117
        %v1321 = vrot.slane %v1320, 1
        %vm1322 = vcmp.eq.s32.totalorder %v1314, 7
        %v1323 = vsel %vm1322, 0.0, %v1321
        %v1324 = vadd.f32 %v1319, %v1323
        %v1325 = vld [vmem:[#allocation17] sm:$0x1]
        %v1326 = vld [vmem:[#allocation19] sm:$0x1]
        %v1328 = vlaneseq
        %v1329 = vshrl.u32 %v1328, 7
        %v1330 = vsub.s32 0, %v1329
        %v1331 = vrot.slane %v1325, %v1330
        %v1333 = vmul.f32 %v1317, %v1331
        %v1335 = vlaneseq
        %v1336 = vshrl.u32 %v1335, 7
        %v1337 = vsub.s32 0, %v1336
        %v1338 = vrot.slane %v1326, %v1337
        %v1340 = vadd.f32 %v1333, %v1338
        %v1341 = vmax.f32 %v1340, 0.0
        %v1342 = vmul.f32 %v1324, %v1331
        %v1343 = vadd.f32 %v1342, %v1338
        %v1344 = vmax.f32 %v1343, 0.0
        %v1345 = vld [vmem:[#allocation14] sm:$0xff]
        %v1346 = vld [vmem:[#allocation14 + $0x8] sm:$0xff]
        %v1347 = vld [vmem:[#allocation14 + $0x10] sm:$0xff]
        %v1348 = vld [vmem:[#allocation14 + $0x18] sm:$0xff]
        %v1349 = vld [vmem:[#allocation14 + $0x20] sm:$0xff]
        %v1350 = vld [vmem:[#allocation14 + $0x28] sm:$0xff]
        %v1351 = vld [vmem:[#allocation14 + $0x30] sm:$0xff]
        %v1352 = vld [vmem:[#allocation14 + $0x38] sm:$0xff]
        %v1353 = vld [vmem:[#allocation14 + $0x40] sm:$0xff]
        %v1354 = vld [vmem:[#allocation14 + $0x48] sm:$0xff]
        %v1355 = vld [vmem:[#allocation14 + $0x50] sm:$0xff]
        %v1356 = vld [vmem:[#allocation14 + $0x58] sm:$0xff]
        %v1357 = vld [vmem:[#allocation14 + $0x60] sm:$0xff]
        %v1358 = vld [vmem:[#allocation14 + $0x68] sm:$0xff]
        %v1359 = vld [vmem:[#allocation14 + $0x70] sm:$0xff]
        %v1360 = vld [vmem:[#allocation14 + $0x78] sm:$0xff]
        %v1361 = vld [vmem:[#allocation14 + $0x80] sm:$0xff]
        %v1362 = vld [vmem:[#allocation14 + $0x88] sm:$0xff]
        %v1363 = vld [vmem:[#allocation14 + $0x90] sm:$0xff]
        %v1364 = vld [vmem:[#allocation14 + $0x98] sm:$0xff]
        %v1365 = vld [vmem:[#allocation14 + $0xa0] sm:$0xff]
        %v1366 = vld [vmem:[#allocation14 + $0xa8] sm:$0xff]
        %v1367 = vld [vmem:[#allocation14 + $0xb0] sm:$0xff]
        %v1368 = vld [vmem:[#allocation14 + $0xb8] sm:$0xff]
        %v1369 = vld [vmem:[#allocation14 + $0xc0] sm:$0xff]
        %v1370 = vld [vmem:[#allocation14 + $0xc8] sm:$0xff]
        %v1371 = vld [vmem:[#allocation14 + $0xd0] sm:$0xff]
        %v1372 = vld [vmem:[#allocation14 + $0xd8] sm:$0xff]
        %v1373 = vld [vmem:[#allocation14 + $0xe0] sm:$0xff]
        %v1374 = vld [vmem:[#allocation14 + $0xe8] sm:$0xff]
        %v1375 = vld [vmem:[#allocation14 + $0xf0] sm:$0xff]
        %v1376 = vld [vmem:[#allocation14 + $0xf8] sm:$0xff]
        %v1377 = vld [vmem:[#allocation14 + $0x100] sm:$0xff]
        %v1378 = vld [vmem:[#allocation14 + $0x108] sm:$0xff]
        %v1379 = vld [vmem:[#allocation14 + $0x110] sm:$0xff]
        %v1380 = vld [vmem:[#allocation14 + $0x118] sm:$0xff]
        %v1381 = vld [vmem:[#allocation14 + $0x120] sm:$0xff]
        %v1382 = vld [vmem:[#allocation14 + $0x128] sm:$0xff]
        %v1383 = vld [vmem:[#allocation14 + $0x130] sm:$0xff]
        %v1384 = vld [vmem:[#allocation14 + $0x138] sm:$0xff]
        %v1385 = vld [vmem:[#allocation14 + $0x140] sm:$0xff]
        %v1386 = vld [vmem:[#allocation14 + $0x148] sm:$0xff]
        %v1387 = vld [vmem:[#allocation14 + $0x150] sm:$0xff]
        %v1388 = vld [vmem:[#allocation14 + $0x158] sm:$0xff]
        %v1389 = vld [vmem:[#allocation14 + $0x160] sm:$0xff]
        %v1390 = vld [vmem:[#allocation14 + $0x168] sm:$0xff]
        %v1391 = vld [vmem:[#allocation14 + $0x170] sm:$0xff]
        %v1392 = vld [vmem:[#allocation14 + $0x178] sm:$0xff]
        %1393 = vmatprep.subr.mxu0 %v1346
        %1394 = vmatpush1.msra.mxu0 %v1345
        %1395 = vmatprep.subr.mxu0 %v1349
        %1396 = vmatpush1.msra.mxu0 %v1348
        %1397 = vmatprep.subr.mxu0 %v1352
        %1398 = vmatpush1.msra.mxu0 %v1351
        %1399 = vmatprep.subr.mxu0 %v1355
        %1400 = vmatpush1.msra.mxu0 %v1354
        %1401 = vmatprep.subr.mxu0 %v1358
        %1402 = vmatpush1.msra.mxu0 %v1357
        %1403 = vmatprep.subr.mxu0 %v1361
        %1404 = vmatpush1.msra.mxu0 %v1360
        %1405 = vmatprep.subr.mxu0 %v1364
        %1406 = vmatpush1.msra.mxu0 %v1363
        %1407 = vmatprep.subr.mxu0 %v1367
        %1408 = vmatpush1.msra.mxu0 %v1366
        %1409 = vmatprep.subr.mxu0 %v1370
        %1410 = vmatpush1.msra.mxu0 %v1369
        %1411 = vmatprep.subr.mxu0 %v1373
        %1412 = vmatpush1.msra.mxu0 %v1372
        %1413 = vmatprep.subr.mxu0 %v1376
        %1414 = vmatpush1.msra.mxu0 %v1375
        %1415 = vmatprep.subr.mxu0 %v1379
        %1416 = vmatpush1.msra.mxu0 %v1378
        %1417 = vmatprep.subr.mxu0 %v1382
        %1418 = vmatpush1.msra.mxu0 %v1381
        %1419 = vmatprep.subr.mxu0 %v1385
        %1420 = vmatpush1.msra.mxu0 %v1384
        %1421 = vmatprep.subr.mxu0 %v1388
        %1422 = vmatpush1.msra.mxu0 %v1387
        %1423 = vmatprep.subr.mxu0 %v1391
        %1424 = vmatpush1.msra.mxu0 %v1390
        %1425 = vmatprep.subr.mxu0 0.0
        %1426 = vmatpush1.msra.mxu0 0.0
        %1427 = vmatprep.subr.mxu0 0.0
        %1428 = vmatpush1.msra.mxu0 0.0
        %1429 = vmatprep.subr.mxu0 0.0
        %1430 = vmatpush1.msra.mxu0 0.0
        %1431 = vmatprep.subr.mxu0 0.0
        %1432 = vmatpush1.msra.mxu0 0.0
        %1433 = vmatprep.subr.mxu0 0.0
        %1434 = vmatpush1.msra.mxu0 0.0
        %1435 = vmatprep.subr.mxu0 0.0
        %1436 = vmatpush1.msra.mxu0 0.0
        %1437 = vmatprep.subr.mxu0 0.0
        %1438 = vmatpush1.msra.mxu0 0.0
        %1439 = vmatprep.subr.mxu0 0.0
        %1440 = vmatpush1.msra.mxu0 0.0
        %1441 = vmatprep.subr.mxu0 0.0
        %1442 = vmatpush1.msra.mxu0 0.0
        %1443 = vmatprep.subr.mxu0 0.0
        %1444 = vmatpush1.msra.mxu0 0.0
        %1445 = vmatprep.subr.mxu0 0.0
        %1446 = vmatpush1.msra.mxu0 0.0
        %1447 = vmatprep.subr.mxu0 0.0
        %1448 = vmatpush1.msra.mxu0 0.0
        %1449 = vmatprep.subr.mxu0 0.0
        %1450 = vmatpush1.msra.mxu0 0.0
        %1451 = vmatprep.subr.mxu0 0.0
        %1452 = vmatpush1.msra.mxu0 0.0
        %1453 = vmatprep.subr.mxu0 0.0
        %1454 = vmatpush1.msra.mxu0 0.0
        %1455 = vmatprep.subr.mxu0 0.0
        %1456 = vmatpush1.msra.mxu0 0.0
        %1457 = vmatprep.mubr.f32.mxu0 0.0
        %1458 = vmatmul.mubr.f32.gmra.mrb[0].mxu0 %v1341
        %v1459 = vpop.f32.mrb[0].mxu0
        %v1460 = vadd.f32 0.0, %v1459
        %v1461 = vpop.f32.mrb[0].mxu0
        %v1462 = vadd.f32 0.0, %v1461
        %1463 = vdwg.mxu0
        %1464 = vmatprep.subr.mxu0 0.0
        %1465 = vmatpush1.msra.mxu0 %v1347
        %1466 = vmatprep.subr.mxu0 0.0
        %1467 = vmatpush1.msra.mxu0 %v1350
        %1468 = vmatprep.subr.mxu0 0.0
        %1469 = vmatpush1.msra.mxu0 %v1353
        %1470 = vmatprep.subr.mxu0 0.0
        %1471 = vmatpush1.msra.mxu0 %v1356
        %1472 = vmatprep.subr.mxu0 0.0
        %1473 = vmatpush1.msra.mxu0 %v1359
        %1474 = vmatprep.subr.mxu0 0.0
        %1475 = vmatpush1.msra.mxu0 %v1362
        %1476 = vmatprep.subr.mxu0 0.0
        %1477 = vmatpush1.msra.mxu0 %v1365
        %1478 = vmatprep.subr.mxu0 0.0
        %1479 = vmatpush1.msra.mxu0 %v1368
        %1480 = vmatprep.subr.mxu0 0.0
        %1481 = vmatpush1.msra.mxu0 %v1371
        %1482 = vmatprep.subr.mxu0 0.0
        %1483 = vmatpush1.msra.mxu0 %v1374
        %1484 = vmatprep.subr.mxu0 0.0
        %1485 = vmatpush1.msra.mxu0 %v1377
        %1486 = vmatprep.subr.mxu0 0.0
        %1487 = vmatpush1.msra.mxu0 %v1380
        %1488 = vmatprep.subr.mxu0 0.0
        %1489 = vmatpush1.msra.mxu0 %v1383
        %1490 = vmatprep.subr.mxu0 0.0
        %1491 = vmatpush1.msra.mxu0 %v1386
        %1492 = vmatprep.subr.mxu0 0.0
        %1493 = vmatpush1.msra.mxu0 %v1389
        %1494 = vmatprep.subr.mxu0 0.0
        %1495 = vmatpush1.msra.mxu0 %v1392
        %1496 = vmatprep.subr.mxu0 0.0
        %1497 = vmatpush1.msra.mxu0 0.0
        %1498 = vmatprep.subr.mxu0 0.0
        %1499 = vmatpush1.msra.mxu0 0.0
        %1500 = vmatprep.subr.mxu0 0.0
        %1501 = vmatpush1.msra.mxu0 0.0
        %1502 = vmatprep.subr.mxu0 0.0
        %1503 = vmatpush1.msra.mxu0 0.0
        %1504 = vmatprep.subr.mxu0 0.0
        %1505 = vmatpush1.msra.mxu0 0.0
        %1506 = vmatprep.subr.mxu0 0.0
        %1507 = vmatpush1.msra.mxu0 0.0
        %1508 = vmatprep.subr.mxu0 0.0
        %1509 = vmatpush1.msra.mxu0 0.0
        %1510 = vmatprep.subr.mxu0 0.0
        %1511 = vmatpush1.msra.mxu0 0.0
        %1512 = vmatprep.subr.mxu0 0.0
        %1513 = vmatpush1.msra.mxu0 0.0
        %1514 = vmatprep.subr.mxu0 0.0
        %1515 = vmatpush1.msra.mxu0 0.0
        %1516 = vmatprep.subr.mxu0 0.0
        %1517 = vmatpush1.msra.mxu0 0.0
        %1518 = vmatprep.subr.mxu0 0.0
        %1519 = vmatpush1.msra.mxu0 0.0
        %1520 = vmatprep.subr.mxu0 0.0
        %1521 = vmatpush1.msra.mxu0 0.0
        %1522 = vmatprep.subr.mxu0 0.0
        %1523 = vmatpush1.msra.mxu0 0.0
        %1524 = vmatprep.subr.mxu0 0.0
        %1525 = vmatpush1.msra.mxu0 0.0
        %1526 = vmatprep.subr.mxu0 0.0
        %1527 = vmatpush1.msra.mxu0 0.0
        %1528 = vmatprep.mubr.f32.mxu0 0.0
        %1529 = vmatmul.mubr.f32.gmra.mrb[0].mxu0 %v1341
        %v1530 = vpop.f32.mrb[0].mxu0
        %v1531 = vadd.f32 0.0, %v1530
        %v1532 = vpop.f32.mrb[0].mxu0
        %1533 = vdwg.mxu0
        %v1534 = vld [vmem:[#allocation16] sm:$0xff]
        %v1535 = vld [vmem:[#allocation16 + $0x8] sm:$0xff]
        %v1536 = vld [vmem:[#allocation16 + $0x10] sm:$0xff]
        %v1537 = vld [vmem:[#allocation16 + $0x18] sm:$0xff]
        %v1538 = vld [vmem:[#allocation16 + $0x20] sm:$0xff]
        %v1539 = vld [vmem:[#allocation16 + $0x28] sm:$0xff]
        %v1540 = vld [vmem:[#allocation16 + $0x30] sm:$0xff]
        %v1541 = vld [vmem:[#allocation16 + $0x38] sm:$0xff]
        %v1542 = vld [vmem:[#allocation16 + $0x40] sm:$0xff]
        %v1543 = vld [vmem:[#allocation16 + $0x48] sm:$0xff]
        %v1544 = vld [vmem:[#allocation16 + $0x50] sm:$0xff]
        %v1545 = vld [vmem:[#allocation16 + $0x58] sm:$0xff]
        %v1546 = vld [vmem:[#allocation16 + $0x60] sm:$0xff]
        %v1547 = vld [vmem:[#allocation16 + $0x68] sm:$0xff]
        %v1548 = vld [vmem:[#allocation16 + $0x70] sm:$0xff]
        %v1549 = vld [vmem:[#allocation16 + $0x78] sm:$0xff]
        %v1550 = vld [vmem:[#allocation16 + $0x80] sm:$0xff]
        %v1551 = vld [vmem:[#allocation16 + $0x88] sm:$0xff]
        %v1552 = vld [vmem:[#allocation16 + $0x90] sm:$0xff]
        %v1553 = vld [vmem:[#allocation16 + $0x98] sm:$0xff]
        %v1554 = vld [vmem:[#allocation16 + $0xa0] sm:$0xff]
        %v1555 = vld [vmem:[#allocation16 + $0xa8] sm:$0xff]
        %v1556 = vld [vmem:[#allocation16 + $0xb0] sm:$0xff]
        %v1557 = vld [vmem:[#allocation16 + $0xb8] sm:$0xff]
        %v1558 = vld [vmem:[#allocation16 + $0xc0] sm:$0xff]
        %v1559 = vld [vmem:[#allocation16 + $0xc8] sm:$0xff]
        %v1560 = vld [vmem:[#allocation16 + $0xd0] sm:$0xff]
        %v1561 = vld [vmem:[#allocation16 + $0xd8] sm:$0xff]
        %v1562 = vld [vmem:[#allocation16 + $0xe0] sm:$0xff]
        %v1563 = vld [vmem:[#allocation16 + $0xe8] sm:$0xff]
        %v1564 = vld [vmem:[#allocation16 + $0xf0] sm:$0xff]
        %v1565 = vld [vmem:[#allocation16 + $0xf8] sm:$0xff]
        %v1566 = vld [vmem:[#allocation16 + $0x100] sm:$0xff]
        %v1567 = vld [vmem:[#allocation16 + $0x108] sm:$0xff]
        %v1568 = vld [vmem:[#allocation16 + $0x110] sm:$0xff]
        %v1569 = vld [vmem:[#allocation16 + $0x118] sm:$0xff]
        %v1570 = vld [vmem:[#allocation16 + $0x120] sm:$0xff]
        %v1571 = vld [vmem:[#allocation16 + $0x128] sm:$0xff]
        %v1572 = vld [vmem:[#allocation16 + $0x130] sm:$0xff]
        %v1573 = vld [vmem:[#allocation16 + $0x138] sm:$0xff]
        %v1574 = vld [vmem:[#allocation16 + $0x140] sm:$0xff]
        %v1575 = vld [vmem:[#allocation16 + $0x148] sm:$0xff]
        %v1576 = vld [vmem:[#allocation16 + $0x150] sm:$0xff]
        %v1577 = vld [vmem:[#allocation16 + $0x158] sm:$0xff]
        %v1578 = vld [vmem:[#allocation16 + $0x160] sm:$0xff]
        %v1579 = vld [vmem:[#allocation16 + $0x168] sm:$0xff]
        %v1580 = vld [vmem:[#allocation16 + $0x170] sm:$0xff]
        %v1581 = vld [vmem:[#allocation16 + $0x178] sm:$0xff]
        %1582 = vmatprep.subr.mxu0 %v1535
        %1583 = vmatpush1.msra.mxu0 %v1534
        %1584 = vmatprep.subr.mxu0 %v1538
        %1585 = vmatpush1.msra.mxu0 %v1537
        %1586 = vmatprep.subr.mxu0 %v1541
        %1587 = vmatpush1.msra.mxu0 %v1540
        %1588 = vmatprep.subr.mxu0 %v1544
        %1589 = vmatpush1.msra.mxu0 %v1543
        %1590 = vmatprep.subr.mxu0 %v1547
        %1591 = vmatpush1.msra.mxu0 %v1546
        %1592 = vmatprep.subr.mxu0 %v1550
        %1593 = vmatpush1.msra.mxu0 %v1549
        %1594 = vmatprep.subr.mxu0 %v1553
        %1595 = vmatpush1.msra.mxu0 %v1552
        %1596 = vmatprep.subr.mxu0 %v1556
        %1597 = vmatpush1.msra.mxu0 %v1555
        %1598 = vmatprep.subr.mxu0 %v1559
        %1599 = vmatpush1.msra.mxu0 %v1558
        %1600 = vmatprep.subr.mxu0 %v1562
        %1601 = vmatpush1.msra.mxu0 %v1561
        %1602 = vmatprep.subr.mxu0 %v1565
        %1603 = vmatpush1.msra.mxu0 %v1564
        %1604 = vmatprep.subr.mxu0 %v1568
        %1605 = vmatpush1.msra.mxu0 %v1567
        %1606 = vmatprep.subr.mxu0 %v1571
        %1607 = vmatpush1.msra.mxu0 %v1570
        %1608 = vmatprep.subr.mxu0 %v1574
        %1609 = vmatpush1.msra.mxu0 %v1573
        %1610 = vmatprep.subr.mxu0 %v1577
        %1611 = vmatpush1.msra.mxu0 %v1576
        %1612 = vmatprep.subr.mxu0 %v1580
        %1613 = vmatpush1.msra.mxu0 %v1579
        %1614 = vmatprep.subr.mxu0 0.0
        %1615 = vmatpush1.msra.mxu0 0.0
        %1616 = vmatprep.subr.mxu0 0.0
        %1617 = vmatpush1.msra.mxu0 0.0
        %1618 = vmatprep.subr.mxu0 0.0
        %1619 = vmatpush1.msra.mxu0 0.0
        %1620 = vmatprep.subr.mxu0 0.0
        %1621 = vmatpush1.msra.mxu0 0.0
        %1622 = vmatprep.subr.mxu0 0.0
        %1623 = vmatpush1.msra.mxu0 0.0
        %1624 = vmatprep.subr.mxu0 0.0
        %1625 = vmatpush1.msra.mxu0 0.0
        %1626 = vmatprep.subr.mxu0 0.0
        %1627 = vmatpush1.msra.mxu0 0.0
        %1628 = vmatprep.subr.mxu0 0.0
        %1629 = vmatpush1.msra.mxu0 0.0
        %1630 = vmatprep.subr.mxu0 0.0
        %1631 = vmatpush1.msra.mxu0 0.0
        %1632 = vmatprep.subr.mxu0 0.0
        %1633 = vmatpush1.msra.mxu0 0.0
        %1634 = vmatprep.subr.mxu0 0.0
        %1635 = vmatpush1.msra.mxu0 0.0
        %1636 = vmatprep.subr.mxu0 0.0
        %1637 = vmatpush1.msra.mxu0 0.0
        %1638 = vmatprep.subr.mxu0 0.0
        %1639 = vmatpush1.msra.mxu0 0.0
        %1640 = vmatprep.subr.mxu0 0.0
        %1641 = vmatpush1.msra.mxu0 0.0
        %1642 = vmatprep.subr.mxu0 0.0
        %1643 = vmatpush1.msra.mxu0 0.0
        %1644 = vmatprep.subr.mxu0 0.0
        %1645 = vmatpush1.msra.mxu0 0.0
        %1646 = vmatprep.mubr.f32.mxu0 0.0
        %1647 = vmatmul.mubr.f32.gmra.mrb[0].mxu0 %v1344
        %v1648 = vpop.f32.mrb[0].mxu0
        %v1649 = vadd.f32 0.0, %v1648
        %v1650 = vpop.f32.mrb[0].mxu0
        %v1651 = vadd.f32 0.0, %v1650
        %1652 = vdwg.mxu0
        %1653 = vmatprep.subr.mxu0 0.0
        %1654 = vmatpush1.msra.mxu0 %v1536
        %1655 = vmatprep.subr.mxu0 0.0
        %1656 = vmatpush1.msra.mxu0 %v1539
        %1657 = vmatprep.subr.mxu0 0.0
        %1658 = vmatpush1.msra.mxu0 %v1542
        %1659 = vmatprep.subr.mxu0 0.0
        %1660 = vmatpush1.msra.mxu0 %v1545
        %1661 = vmatprep.subr.mxu0 0.0
        %1662 = vmatpush1.msra.mxu0 %v1548
        %1663 = vmatprep.subr.mxu0 0.0
        %1664 = vmatpush1.msra.mxu0 %v1551
        %1665 = vmatprep.subr.mxu0 0.0
        %1666 = vmatpush1.msra.mxu0 %v1554
        %1667 = vmatprep.subr.mxu0 0.0
        %1668 = vmatpush1.msra.mxu0 %v1557
        %1669 = vmatprep.subr.mxu0 0.0
        %1670 = vmatpush1.msra.mxu0 %v1560
        %1671 = vmatprep.subr.mxu0 0.0
        %1672 = vmatpush1.msra.mxu0 %v1563
        %1673 = vmatprep.subr.mxu0 0.0
        %1674 = vmatpush1.msra.mxu0 %v1566
        %1675 = vmatprep.subr.mxu0 0.0
        %1676 = vmatpush1.msra.mxu0 %v1569
        %1677 = vmatprep.subr.mxu0 0.0
        %1678 = vmatpush1.msra.mxu0 %v1572
        %1679 = vmatprep.subr.mxu0 0.0
        %1680 = vmatpush1.msra.mxu0 %v1575
        %1681 = vmatprep.subr.mxu0 0.0
        %1682 = vmatpush1.msra.mxu0 %v1578
        %1683 = vmatprep.subr.mxu0 0.0
        %1684 = vmatpush1.msra.mxu0 %v1581
        %1685 = vmatprep.subr.mxu0 0.0
        %1686 = vmatpush1.msra.mxu0 0.0
        %1687 = vmatprep.subr.mxu0 0.0
        %1688 = vmatpush1.msra.mxu0 0.0
        %1689 = vmatprep.subr.mxu0 0.0
        %1690 = vmatpush1.msra.mxu0 0.0
        %1691 = vmatprep.subr.mxu0 0.0
        %1692 = vmatpush1.msra.mxu0 0.0
        %1693 = vmatprep.subr.mxu0 0.0
        %1694 = vmatpush1.msra.mxu0 0.0
        %1695 = vmatprep.subr.mxu0 0.0
        %1696 = vmatpush1.msra.mxu0 0.0
        %1697 = vmatprep.subr.mxu0 0.0
        %1698 = vmatpush1.msra.mxu0 0.0
        %1699 = vmatprep.subr.mxu0 0.0
        %1700 = vmatpush1.msra.mxu0 0.0
        %1701 = vmatprep.subr.mxu0 0.0
        %1702 = vmatpush1.msra.mxu0 0.0
        %1703 = vmatprep.subr.mxu0 0.0
        %1704 = vmatpush1.msra.mxu0 0.0
        %1705 = vmatprep.subr.mxu0 0.0
        %1706 = vmatpush1.msra.mxu0 0.0
        %1707 = vmatprep.subr.mxu0 0.0
        %1708 = vmatpush1.msra.mxu0 0.0
        %1709 = vmatprep.subr.mxu0 0.0
        %1710 = vmatpush1.msra.mxu0 0.0
        %1711 = vmatprep.subr.mxu0 0.0
        %1712 = vmatpush1.msra.mxu0 0.0
        %1713 = vmatprep.subr.mxu0 0.0
        %1714 = vmatpush1.msra.mxu0 0.0
        %1715 = vmatprep.subr.mxu0 0.0
        %1716 = vmatpush1.msra.mxu0 0.0
        %1717 = vmatprep.mubr.f32.mxu0 0.0
        %1718 = vmatmul.mubr.f32.gmra.mrb[0].mxu0 %v1344
        %v1719 = vpop.f32.mrb[0].mxu0
        %v1720 = vadd.f32 0.0, %v1719
        %v1721 = vpop.f32.mrb[0].mxu0
        %1722 = vdwg.mxu0
        %v1723 = vadd.f32 %v1460, %v1649
        %v1724 = vrot.slane %v1651, 7
        %v1725 = vsel %vm1315, 0.0, %v1724
        %v1726 = vadd.f32 %v1723, %v1725
        %v1727 = vadd.f32 %v1462, %v1720
        %v1728 = vrot.slane %v1531, 1
        %v1729 = vsel %vm1322, 0.0, %v1728
        %v1730 = vadd.f32 %v1727, %v1729
        %v1731 = vld [vmem:[#allocation20] sm:$0x1]
        %v1732 = vld [vmem:[#allocation22] sm:$0x1]
        %v1734 = vlaneseq
        %v1735 = vshrl.u32 %v1734, 7
        %v1736 = vsub.s32 0, %v1735
        %v1737 = vrot.slane %v1731, %v1736
        %v1739 = vmul.f32 %v1726, %v1737
        %v1741 = vlaneseq
        %v1742 = vshrl.u32 %v1741, 7
        %v1743 = vsub.s32 0, %v1742
        %v1744 = vrot.slane %v1732, %v1743
        %v1746 = vadd.f32 %v1739, %v1744
        %v1747 = vmax.f32 %v1746, 0.0
        %1748 = vst [vmem:[%s692] sm:$0xff] %v1747
        %v1749 = vmul.f32 %v1730, %v1737
        %v1750 = vadd.f32 %v1749, %v1744
        %v1751 = vmax.f32 %v1750, 0.0
        %1752 = vst [vmem:[%s699] sm:$0xff] %v1751
        %s1753 = sand.u32 %s339, 1
        %s1754 = scalar_lea.sflag [#allocation4], %s1753
        %s1755 = sand.u32 %s339, 1
        %s1756 = smul.addr %s1755, 8
        %s1757 = scalar_lea.vmem [#allocation23], %s1756
        %s1758 = sand.u32 %s365, 1
        %s1759 = scalar_lea.sflag [#allocation25], %s1758
        %s1760 = sand.u32 %s365, 1
        %s1761 = smul.addr %s1760, 8
        %s1762 = scalar_lea.vmem [#allocation24], %s1761
        // Predicated region
        $region125: #{upsample_forward.1} parent=71 // pred_check
          %p1763 = pneg %p349
        $region126: #{upsample_forward.1} parent=71 // pred_check_branch
          %1765 = sbr.rel (%p1763) target = $region128
        $region127: #{upsample_forward.1} parent=71 // pred_region
          %s1767 = ssub.s32 128, 128
          %1768 = vsyncadd %s1754, %s1767
          %s1769 = smul.addr %s43, 128
          %s1770 = scalar_lea.hbm %s13, %s1769
          %s1772 = sshll.u32 %s1757, 4
          %s1773 = int_to_ptr.vmem [resolvable:$true] %s1772
          %1775 = dma.vmem_to_hbm [thread:$0]  %s1773, 128, %s1770, %s1754
        $region128: #{upsample_forward.1} parent=71 // pred_fallthru
          _
        // Predicated region
        $region129: #{upsample_forward.1} parent=71 // pred_check
          %p1776 = pneg %p375
        $region130: #{upsample_forward.1} parent=71 // pred_check_branch
          %1778 = sbr.rel (%p1776) target = $region132
        $region131: #{upsample_forward.1} parent=71 // pred_region
          %s1780 = ssub.s32 128, 128
          %1781 = vsyncadd %s1759, %s1780
          %s1782 = smul.addr %s43, 128
          %s1783 = scalar_lea.hbm %s14, %s1782
          %s1785 = sshll.u32 %s1762, 4
          %s1786 = int_to_ptr.vmem [resolvable:$true] %s1785
          %1788 = dma.vmem_to_hbm [thread:$0]  %s1786, 128, %s1783, %s1759
        $region132: #{upsample_forward.1} parent=71 // pred_fallthru
          _
      $region72: #{upsample_forward.1} parent=5 // pred_fallthru
        _
      %p1789 = scmp.le.s32.totalorder 2, %s38
      // Predicated region
      $region133: #{upsample_forward.1} parent=5 // pred_check
        %p1790 = pneg %p1789
      $region134: #{upsample_forward.1} parent=5 // pred_check_branch
        %1792 = sbr.rel (%p1790) target = $region136
      $region135: #{upsample_forward.1} parent=5 // pred_region
        %s1793 = ssub.s32 %s38, 2
        // Predicated region
        $region137: #{upsample_forward.1} parent=135 // pred_check
          %p1794 = pneg %p355
        $region138: #{upsample_forward.1} parent=135 // pred_check_branch
          %1796 = sbr.rel (%p1794) target = $region140
        $region139: #{upsample_forward.1} parent=135 // pred_region
          %s1797 = sand.u32 %s340, 1
          %s1798 = scalar_lea.sflag [#allocation4], %s1797
          %s1799 = sand.u32 %s340, 1
          %s1800 = smul.addr %s1799, 8
          %s1801 = scalar_lea.vmem [#allocation23], %s1800
          %1802 = dma.done %s1798, 128
        $region140: #{upsample_forward.1} parent=135 // pred_fallthru
          _
        // Predicated region
        $region141: #{upsample_forward.1} parent=135 // pred_check
          %p1803 = pneg %p381
        $region142: #{upsample_forward.1} parent=135 // pred_check_branch
          %1805 = sbr.rel (%p1803) target = $region144
        $region143: #{upsample_forward.1} parent=135 // pred_region
          %s1806 = sand.u32 %s366, 1
          %s1807 = scalar_lea.sflag [#allocation25], %s1806
          %s1808 = sand.u32 %s366, 1
          %s1809 = smul.addr %s1808, 8
          %s1810 = scalar_lea.vmem [#allocation24], %s1809
          %1811 = dma.done %s1807, 128
        $region144: #{upsample_forward.1} parent=135 // pred_fallthru
          _
      $region136: #{upsample_forward.1} parent=5 // pred_fallthru
        _
    $region6: #{upsample_forward.1} parent=1 // loop_footer
      %s42 = sadd.s32 1, %s38
    $region7: #{upsample_forward.1} parent=1 // loop_footer_branch
      %37 = sbr.rel target = $region3
    $region8: #{upsample_forward.1} parent=1 // loop_exit
      _
    %1812 = vsyncpa [#allocation3], 1
    %s1813 = scalar_lea.sflag [#allocation3], 1
    %1814 = vsyncpa %s1813, 1
    %1815 = vsyncpa [#allocation6], 1
    %s1816 = scalar_lea.sflag [#allocation6], 1
    %1817 = vsyncpa %s1816, 1
    %1818 = vsyncpa [#allocation9], 1
    %1819 = vsyncpa [#allocation12], 1
    %1820 = vsyncpa [#allocation15], 1
    %1821 = vsyncpa [#allocation18], 1
    %1822 = vsyncpa [#allocation21], 1
    %1823 = vsyncpa [#allocation4], 1
    %s1824 = scalar_lea.sflag [#allocation4], 1
    %1825 = vsyncpa %s1824, 1
    %1826 = vsyncpa [#allocation25], 1
    %s1827 = scalar_lea.sflag [#allocation25], 1
    %1828 = vsyncpa %s1827, 1

</llo_original>
